<compile_context>
chip_gen: v7x
topology: tpu7x:2x2x1
jax: 0.10.0
libtpu: 0.0.40
codegen_flags: <defaults>
</compile_context>

<pallas_src>
import math
import functools

import jax
import jax.numpy as jnp
from jax import lax
from jax.experimental import pallas as pl
from jax.experimental.pallas import tpu as pltpu

IGNORE = -100000.0  # same constant the PyTorch module registers as a buffer


def _round_up(x, m):
    return ((x + m - 1) // m) * m


def _choose_seq_tile(s, target):
    """Largest multiple-of-8 divisor of s that is <= target (else s: no tiling)."""
    if s <= target:
        return s
    for t in range(target, 7, -1):
        if s % t == 0 and t % 8 == 0:
            return t
    return s  # TODO(synk): pad ragged S instead of falling back to a full-S tile


def _flash_attn_kernel(x_ref, wq_ref, wkv_ref, wo_ref, bq_ref, bkv_ref, bo_ref,
                       o_ref, kv_ref, z_ref, *, H, DHP, TQ, TK, S):
    """One (batch, q_tile) grid step: flash attention over all heads + fused projections."""
    qi = pl.program_id(1)
    HD = H * DHP
    n_kv_tiles = S // TK

    # ---- K/V projection for the whole sequence: once per batch element (qi == 0) ----
    @pl.when(qi == 0)
    def _():
        wkv = wkv_ref[...]                                   # (D, 2*HD) bf16
        bkv = bkv_ref[...]                                   # (1, 2*HD) f32

        def proj_tile(t, carry):
            r = pl.multiple_of(t * TK, TK)
            xt = x_ref[0, pl.ds(r, TK), :].astype(jnp.bfloat16)          # (TK, D)
            kvt = jnp.dot(xt, wkv, preferred_element_type=jnp.float32) + bkv
            kv_ref[pl.ds(r, TK), :] = kvt.astype(jnp.bfloat16)
            return carry

        lax.fori_loop(0, n_kv_tiles, proj_tile, 0)

    # ---- Q projection for this query tile (1/attn_scale already folded into W_Q, b_Q) ----
    q_start = pl.multiple_of(qi * TQ, TQ)
    xq = x_ref[0, pl.ds(q_start, TQ), :].astype(jnp.bfloat16)            # (TQ, D)
    q = (jnp.dot(xq, wq_ref[...], preferred_element_type=jnp.float32)
         + bq_ref[...]).astype(jnp.bfloat16)                             # (TQ, HD)

    # Causal mask is only ever applied on the diagonal tile; there it is tile-local
    # (q_start == k_start), so it is a single static (TQ, TK) boolean shared by all heads.
    row = lax.broadcasted_iota(jnp.int32, (TQ, TK), 0)
    col = lax.broadcasted_iota(jnp.int32, (TQ, TK), 1)
    diag_mask = row >= col

    def attend(qh, kh, vh, m_prev, l_prev, acc_prev, mask):
        # q @ k^T without an in-kernel transpose (contract last dims of both operands).
        s = lax.dot_general(qh, kh, (((1,), (1,)), ((), ())),
                            preferred_element_type=jnp.float32)          # (TQ, TK)
        if mask is not None:
            s = jnp.where(mask, s, IGNORE)
        m_new = jnp.maximum(m_prev, jnp.max(s, axis=-1, keepdims=True))
        alpha = jnp.exp(m_prev - m_new)
        p = jnp.exp(s - m_new)
        l_new = alpha * l_prev + jnp.sum(p, axis=-1, keepdims=True)
        acc_new = alpha * acc_prev + jnp.dot(p.astype(jnp.bfloat16), vh,
                                             preferred_element_type=jnp.float32)
        return m_new, l_new, acc_new

    for h in range(H):                       # static unroll over heads
        c0 = h * DHP
        qh = q[:, c0:c0 + DHP]               # (TQ, DHP) bf16, 128-lane-aligned slice

        m0 = jnp.full((TQ, 1), -jnp.inf, jnp.float32)
        l0 = jnp.zeros((TQ, 1), jnp.float32)
        a0 = jnp.zeros((TQ, DHP), jnp.float32)

        def kv_step(kvi, carry):
            m_prev, l_prev, acc_prev = carry
            ks = pl.multiple_of(kvi * TK, TK)
            kh = kv_ref[pl.ds(ks, TK), c0:c0 + DHP]                      # (TK, DHP) bf16
            vh = kv_ref[pl.ds(ks, TK), HD + c0:HD + c0 + DHP]            # (TK, DHP) bf16
            return attend(qh, kh, vh, m_prev, l_prev, acc_prev, None)

        # Off-diagonal (fully causal-visible) kv tiles: no masking at all.  Tiles strictly
        # above the diagonal are skipped entirely (causal tile skipping).
        m, l, acc = lax.fori_loop(0, qi, kv_step, (m0, l0, a0))

        # Diagonal tile: the only tile that needs the causal mask.
        kh = kv_ref[pl.ds(q_start, TK), c0:c0 + DHP]
        vh = kv_ref[pl.ds(q_start, TK), HD + c0:HD + c0 + DHP]
        m, l, acc = attend(qh, kh, vh, m, l, acc, diag_mask)

        inv = pl.reciprocal(l, approx=True)                  # EUP slot, not a VPU divide
        z_ref[:, c0:c0 + DHP] = (acc * inv).astype(jnp.bfloat16)

    # ---- One wide, lane-dense output projection for all heads at once ----
    out = jnp.dot(z_ref[...], wo_ref[...], preferred_element_type=jnp.float32) + bo_ref[...]
    o_ref[0] = out.astype(o_ref.dtype)


def attention_parallel_split_heads(x, W_Q, W_K, W_V, W_O, b_Q, b_K, b_V, b_O,
                                   *, use_attn_scale=True, seq_tile=None):
    """world_size == 1 path of AttentionParallelSplitHeads (global causal attention)."""
    B, S, D = x.shape
    H, DH, _ = W_Q.shape
    attn_scale = math.sqrt(DH) if use_attn_scale else 1.0

    # --- generation-aware budgets (v5e/v6e: 128 MiB VMEM, v7x: 64 MiB) -------------------
    try:
        vmem_cap = pltpu.get_tpu_info().vmem_capacity_bytes
    except Exception:
        vmem_cap = 64 * 1024 * 1024          # conservative (v7x-sized) fallback
    vmem_limit = min(int(vmem_cap * 7 // 8), 112 * 1024 * 1024)
    seq_tile_target = 512 if vmem_cap >= 96 * 1024 * 1024 else 256

    DHP = _round_up(DH, 128)                 # per-head dim padded to 128 lanes (aligned slices)
    HD = H * DHP
    if seq_tile is not None:
        assert S % seq_tile == 0, "seq_tile must divide S"
        TQ = TK = seq_tile
    else:
        TQ = TK = _choose_seq_tile(S, seq_tile_target)
    NQ = S // TQ

    # --- host-side one-time weight packing (pre-transposed, zero-padded, bf16) -----------
    Wq = W_Q / attn_scale                    # fold 1/attn_scale into the Q projection
    bq = b_Q / attn_scale

    def pack_w(W):                           # (H, DH, D) -> (D, H*DHP), zero-padded per head
        Wt = jnp.transpose(W, (2, 0, 1))                     # (D, H, DH)
        Wt = jnp.pad(Wt, ((0, 0), (0, 0), (0, DHP - DH)))    # (D, H, DHP)
        return Wt.reshape(D, HD)

    def pack_b(b):                           # (H, DH) -> (1, H*DHP)
        return jnp.pad(b, ((0, 0), (0, DHP - DH))).reshape(1, HD)

    wq_p = pack_w(Wq).astype(jnp.bfloat16)                                        # (D, HD)
    wkv_p = jnp.concatenate([pack_w(W_K), pack_w(W_V)], -1).astype(jnp.bfloat16)  # (D, 2*HD)
    bq_p = pack_b(bq).astype(jnp.float32)                                         # (1, HD)
    bkv_p = jnp.concatenate([pack_b(b_K), pack_b(b_V)], -1).astype(jnp.float32)   # (1, 2*HD)
    # W_O: (H, D, DH) -> (H*DHP, D); padded rows are zero so they contribute nothing.
    wo_p = jnp.pad(jnp.transpose(W_O, (0, 2, 1)), ((0, 0), (0, DHP - DH), (0, 0)))
    wo_p = wo_p.reshape(HD, D).astype(jnp.bfloat16)                               # (HD, D)
    bo_p = b_O.reshape(1, D).astype(jnp.float32)
    # --------------------------------------------------------------------------------------

    kernel = functools.partial(_flash_attn_kernel, H=H, DHP=DHP, TQ=TQ, TK=TK, S=S)

    grid_spec = pltpu.PrefetchScalarGridSpec(
        num_scalar_prefetch=0,
        grid=(B, NQ),
        in_specs=[
            # x: resident per batch element (block index constant across the q-tile axis).
            pl.BlockSpec((1, S, D), lambda b, qi: (b, 0, 0)),
            # Weights/biases: constant block index over the whole grid -> single DMA.
            pl.BlockSpec((D, HD), lambda b, qi: (0, 0)),          # W_Q (pre-T, scaled, padded)
            pl.BlockSpec((D, 2 * HD), lambda b, qi: (0, 0)),      # W_K | W_V fused
            pl.BlockSpec((HD, D), lambda b, qi: (0, 0)),          # W_O (pre-T, padded)
            pl.BlockSpec((1, HD), lambda b, qi: (0, 0)),          # b_Q (scaled, padded)
            pl.BlockSpec((1, 2 * HD), lambda b, qi: (0, 0)),      # b_K | b_V
            pl.BlockSpec((1, D), lambda b, qi: (0, 0)),           # b_O
        ],
        out_specs=pl.BlockSpec((1, TQ, D), lambda b, qi: (b, qi, 0)),
        scratch_shapes=[
            pltpu.VMEM((S, 2 * HD), jnp.bfloat16),   # K/V for all heads (filled at qi == 0)
            pltpu.VMEM((TQ, HD), jnp.bfloat16),      # per-tile z slab (lane-dense out proj)
        ],
    )

    return pl.pallas_call(
        kernel,
        out_shape=jax.ShapeDtypeStruct((B, S, D), x.dtype),
        grid_spec=grid_spec,
        compiler_params=pltpu.CompilerParams(
            dimension_semantics=("parallel", "arbitrary"),
            vmem_limit_bytes=vmem_limit),
    )(x, wq_p, wkv_p, wo_p, bq_p, bkv_p, bo_p)


def _reference_attention(x, W_Q, W_K, W_V, W_O, b_Q, b_K, b_V, b_O, use_attn_scale=True):
    """Pure-JAX reference mirroring the PyTorch einsum chain."""
    B, S, D = x.shape
    H, DH, _ = W_Q.shape
    scale = math.sqrt(DH) if use_attn_scale else 1.0
    q = jnp.einsum('ihm,bpm->bpih', W_Q, x) + b_Q
    k = jnp.einsum('ihm,bpm->bpih', W_K, x) + b_K
    v = jnp.einsum('ihm,bpm->bpih', W_V, x) + b_V
    scores = jnp.einsum('bpih,bqih->bipq', q, k) / scale
    mask = jnp.tril(jnp.ones((S, S), dtype=bool))
    scores = jnp.where(mask, scores, IGNORE)
    attn = jax.nn.softmax(scores, axis=-1)
    z = jnp.einsum('bpih,biqp->bqih', v, attn)
    return jnp.einsum('idh,bqih->bqd', W_O, z) + b_O


def _make_params(key, B, S, D, H, DH):
    ks = jax.random.split(key, 9)
    x = jax.random.normal(ks[0], (B, S, D), dtype=jnp.float32)
    W_Q = jax.random.normal(ks[1], (H, DH, D), dtype=jnp.float32) * 0.1
    W_K = jax.random.normal(ks[2], (H, DH, D), dtype=jnp.float32) * 0.1
    W_V = jax.random.normal(ks[3], (H, DH, D), dtype=jnp.float32) * 0.1
    W_O = jax.random.normal(ks[4], (H, D, DH), dtype=jnp.float32) * 0.1
    b_Q = jax.random.normal(ks[5], (H, DH), dtype=jnp.float32) * 0.02
    b_K = jax.random.normal(ks[6], (H, DH), dtype=jnp.float32) * 0.02
    b_V = jax.random.normal(ks[7], (H, DH), dtype=jnp.float32) * 0.02
    b_O = jax.random.normal(ks[8], (D,), dtype=jnp.float32) * 0.02
    return x, W_Q, W_K, W_V, W_O, b_Q, b_K, b_V, b_O


if __name__ == "__main__":
    # 1) Module-consistent small config (world_size = 1 -> local n_heads == n_heads).
    B, S, D, H, DH = 2, 8, 32, 4, 8   # batch, seq(=n_ctx), d_model, n_heads, d_head
    params = _make_params(jax.random.PRNGKey(0), B, S, D, H, DH)
    out = attention_parallel_split_heads(*params)
    out = jax.block_until_ready(out)
    ref = _reference_attention(*params)
    assert out.shape == (B, S, D)
    # bf16 matmul operands + approx EUP reciprocal -> slightly loosened tolerance
    assert jnp.allclose(out, ref, atol=2e-2, rtol=2e-2), "mismatch vs reference (small cfg)"
    rel = jnp.linalg.norm(out - ref) / jnp.linalg.norm(ref)
    assert rel < 1e-2, f"relative error too large (small cfg): {rel}"

    # 2) A config that actually exercises the flash (TQ, TK) tiling / causal tile skipping.
    B2, S2, D2, H2, DH2 = 1, 512, 128, 2, 64
    params2 = _make_params(jax.random.PRNGKey(1), B2, S2, D2, H2, DH2)
    out2 = attention_parallel_split_heads(*params2, seq_tile=128)   # -> 4 query tiles
    out2 = jax.block_until_ready(out2)
    ref2 = _reference_attention(*params2)
    assert out2.shape == (B2, S2, D2)
    rel2 = jnp.linalg.norm(out2 - ref2) / jnp.linalg.norm(ref2)
    assert rel2 < 2e-2, f"relative error too large (tiled cfg): {rel2}"

    print("KERNEL_OK")
</pallas_src>

<mosaic_0001>
module attributes {stable_mosaic.version = 11 : i64} {
  func.func @_flash_attn_kernel(%arg0: i32, %arg1: i32, %arg2: memref<1x8x32xf32, #tpu.memory_space<vmem>>, %arg3: memref<32x512xbf16, #tpu.memory_space<vmem>>, %arg4: memref<32x1024xbf16, #tpu.memory_space<vmem>>, %arg5: memref<512x32xbf16, #tpu.memory_space<vmem>>, %arg6: memref<1x512xf32, #tpu.memory_space<vmem>>, %arg7: memref<1x1024xf32, #tpu.memory_space<vmem>>, %arg8: memref<1x32xf32, #tpu.memory_space<vmem>>, %arg9: memref<1x8x32xf32, #tpu.memory_space<vmem>>, %arg10: memref<8x1024xbf16, #tpu.memory_space<vmem>>, %arg11: memref<8x512xbf16, #tpu.memory_space<vmem>>) attributes {dimension_semantics = [#tpu.dimension_semantics<parallel>, #tpu.dimension_semantics<arbitrary>], iteration_bounds = array<i64: 2, 1>, scalar_prefetch = 0 : i64, scratch_operands = 2 : i64, tpu.core_type = #tpu.core_type<tc>, window_params = [{transform_indices = @transform_0, window_bounds = array<i64: 1, 8, 32>}, {pipeline_mode = #tpu.pipeline_mode<synchronous>, transform_indices = @transform_1, window_bounds = array<i64: 32, 512>}, {pipeline_mode = #tpu.pipeline_mode<synchronous>, transform_indices = @transform_2, window_bounds = array<i64: 32, 1024>}, {pipeline_mode = #tpu.pipeline_mode<synchronous>, transform_indices = @transform_3, window_bounds = array<i64: 512, 32>}, {pipeline_mode = #tpu.pipeline_mode<synchronous>, transform_indices = @transform_4, window_bounds = array<i64: 1, 512>}, {pipeline_mode = #tpu.pipeline_mode<synchronous>, transform_indices = @transform_5, window_bounds = array<i64: 1, 1024>}, {pipeline_mode = #tpu.pipeline_mode<synchronous>, transform_indices = @transform_6, window_bounds = array<i64: 1, 32>}, {transform_indices = @transform_7, window_bounds = array<i64: 1, 8, 32>}]} {
    %c0_i32 = arith.constant 0 : i32
    %0 = arith.cmpi eq, %arg1, %c0_i32 : i32
    %1 = arith.extui %0 : i1 to i32
    %c0_i32_0 = arith.constant 0 : i32
    %2 = arith.cmpi ne, %1, %c0_i32_0 : i32
    scf.if %2 {
      %c0_64 = arith.constant 0 : index
      %c0_65 = arith.constant 0 : index
      %171 = vector.load %arg4[%c0_64, %c0_65] : memref<32x1024xbf16, #tpu.memory_space<vmem>>, vector<32x1024xbf16>
      %c0_66 = arith.constant 0 : index
      %c0_67 = arith.constant 0 : index
      %172 = vector.load %arg7[%c0_66, %c0_67] : memref<1x1024xf32, #tpu.memory_space<vmem>>, vector<1x1024xf32>
      %c0_i32_68 = arith.constant 0 : i32
      %c8_i32_69 = arith.constant 8 : i32
      %173 = arith.muli %c0_i32_68, %c8_i32_69 : i32
      %174 = tpu.assume_multiple %173, 8 : i32
      %c0_70 = arith.constant 0 : index
      %175 = arith.index_cast %174 : i32 to index
      %c0_71 = arith.constant 0 : index
      %176 = vector.load %arg2[%c0_70, %175, %c0_71] : memref<1x8x32xf32, #tpu.memory_space<vmem>>, vector<1x8x32xf32>
      %177 = vector.shape_cast %176 : vector<1x8x32xf32> to vector<8x32xf32>
      %178 = arith.truncf %177 : vector<8x32xf32> to vector<8x32xbf16>
      %cst_72 = arith.constant dense<0.000000e+00> : vector<8x1024xf32>
      %179 = tpu.matmul %178, %171, %cst_72 {dimension_numbers = #tpu.dot_dimension_numbers<[1], [0], [0], [1], [0, 0, 1, 1], [], []>} : vector<8x32xbf16>, vector<32x1024xbf16>, vector<8x1024xf32> -> vector<8x1024xf32>
      %180 = vector.broadcast %172 : vector<1x1024xf32> to vector<8x1024xf32>
      %181 = arith.addf %179, %180 : vector<8x1024xf32>
      %182 = arith.truncf %181 : vector<8x1024xf32> to vector<8x1024xbf16>
      %183 = arith.index_cast %174 : i32 to index
      %c0_73 = arith.constant 0 : index
      %184 = vector.load %arg10[%183, %c0_73] : memref<8x1024xbf16, #tpu.memory_space<vmem>>, vector<8x1024xbf16>
      tpu.vector_store %arg10[%183, %c0_73], %182 {strides = array<i32>} : memref<8x1024xbf16, #tpu.memory_space<vmem>>, vector<8x1024xbf16>,
      %c1_i32_74 = arith.constant 1 : i32
    } else {
    }
    %c8_i32 = arith.constant 8 : i32
    %3 = arith.muli %arg1, %c8_i32 : i32
    %4 = tpu.assume_multiple %3, 8 : i32
    %c0 = arith.constant 0 : index
    %5 = arith.index_cast %4 : i32 to index
    %c0_1 = arith.constant 0 : index
    %6 = vector.load %arg2[%c0, %5, %c0_1] : memref<1x8x32xf32, #tpu.memory_space<vmem>>, vector<1x8x32xf32>
    %7 = vector.shape_cast %6 : vector<1x8x32xf32> to vector<8x32xf32>
    %8 = arith.truncf %7 : vector<8x32xf32> to vector<8x32xbf16>
    %c0_2 = arith.constant 0 : index
    %c0_3 = arith.constant 0 : index
    %9 = vector.load %arg3[%c0_2, %c0_3] : memref<32x512xbf16, #tpu.memory_space<vmem>>, vector<32x512xbf16>
    %cst = arith.constant dense<0.000000e+00> : vector<8x512xf32>
    %10 = tpu.matmul %8, %9, %cst {dimension_numbers = #tpu.dot_dimension_numbers<[1], [0], [0], [1], [0, 0, 1, 1], [], []>} : vector<8x32xbf16>, vector<32x512xbf16>, vector<8x512xf32> -> vector<8x512xf32>
    %c0_4 = arith.constant 0 : index
    %c0_5 = arith.constant 0 : index
    %11 = vector.load %arg6[%c0_4, %c0_5] : memref<1x512xf32, #tpu.memory_space<vmem>>, vector<1x512xf32>
    %12 = vector.broadcast %11 : vector<1x512xf32> to vector<8x512xf32>
    %13 = arith.addf %10, %12 : vector<8x512xf32>
    %14 = arith.truncf %13 : vector<8x512xf32> to vector<8x512xbf16>
    %15 = tpu.iota {dimensions = array<i32: 0>} : vector<8x8xi32>
    %16 = tpu.iota {dimensions = array<i32: 1>} : vector<8x8xi32>
    %17 = arith.cmpi sge, %15, %16 : vector<8x8xi32>
    %18 = vector.extract_strided_slice %14 {offsets = [0, 0], sizes = [8, 128], strides = [1, 1]} : vector<8x512xbf16> to vector<8x128xbf16>
    %cst_6 = arith.constant 0xFF800000 : f32
    %19 = vector.broadcast %cst_6 : f32 to vector<8x1xf32>
    %cst_7 = arith.constant 0.000000e+00 : f32
    %20 = vector.broadcast %cst_7 : f32 to vector<8x1xf32>
    %cst_8 = arith.constant 0.000000e+00 : f32
    %21 = vector.broadcast %cst_8 : f32 to vector<8x128xf32>
    %c0_i32_9 = arith.constant 0 : i32
    %22 = arith.subi %arg1, %c0_i32_9 : i32
    %23 = arith.addi %c0_i32_9, %22 : i32
    %c1_i32 = arith.constant 1 : i32
    %24:3 = scf.for %arg12 = %c0_i32_9 to %23 step %c1_i32 iter_args(%arg13 = %19, %arg14 = %20, %arg15 = %21) -> (vector<8x1xf32>, vector<8x1xf32>, vector<8x128xf32>)  : i32 {
      %c8_i32_64 = arith.constant 8 : i32
      %171 = arith.muli %arg12, %c8_i32_64 : i32
      %172 = tpu.assume_multiple %171, 8 : i32
      %173 = arith.index_cast %172 : i32 to index
      %c0_65 = arith.constant 0 : index
      %174 = vector.load %arg10[%173, %c0_65] : memref<8x1024xbf16, #tpu.memory_space<vmem>>, vector<8x128xbf16>
      %175 = arith.index_cast %172 : i32 to index
      %c512_66 = arith.constant 512 : index
      %176 = vector.load %arg10[%175, %c512_66] : memref<8x1024xbf16, #tpu.memory_space<vmem>>, vector<8x128xbf16>
      %cst_67 = arith.constant dense<0.000000e+00> : vector<8x8xf32>
      %177 = tpu.matmul %18, %174, %cst_67 {dimension_numbers = #tpu.dot_dimension_numbers<[1], [1], [0], [0], [0, 0, 1, 0], [], []>} : vector<8x128xbf16>, vector<8x128xbf16>, vector<8x8xf32> -> vector<8x8xf32>
      %cst_68 = arith.constant dense<0xFF800000> : vector<8xf32>
      %178 = vector.multi_reduction <maximumf>, %177, %cst_68 [1] : vector<8x8xf32> to vector<8xf32>
      %179 = vector.shape_cast %178 : vector<8xf32> to vector<8x1xf32>
      %180 = arith.maximumf %arg13, %179 : vector<8x1xf32>
      %181 = arith.subf %arg13, %180 : vector<8x1xf32>
      %182 = math.exp %181 : vector<8x1xf32>
      %183 = vector.broadcast %180 : vector<8x1xf32> to vector<8x8xf32>
      %184 = arith.subf %177, %183 : vector<8x8xf32>
      %185 = math.exp %184 : vector<8x8xf32>
      %186 = arith.mulf %182, %arg14 : vector<8x1xf32>
      %cst_69 = arith.constant dense<0.000000e+00> : vector<8xf32>
      %187 = vector.multi_reduction <add>, %185, %cst_69 [1] : vector<8x8xf32> to vector<8xf32>
      %188 = vector.shape_cast %187 : vector<8xf32> to vector<8x1xf32>
      %189 = arith.addf %186, %188 : vector<8x1xf32>
      %190 = vector.broadcast %182 : vector<8x1xf32> to vector<8x128xf32>
      %191 = arith.mulf %190, %arg15 : vector<8x128xf32>
      %192 = arith.truncf %185 : vector<8x8xf32> to vector<8x8xbf16>
      %cst_70 = arith.constant dense<0.000000e+00> : vector<8x128xf32>
      %193 = tpu.matmul %192, %176, %cst_70 {dimension_numbers = #tpu.dot_dimension_numbers<[1], [0], [0], [1], [0, 0, 1, 1], [], []>} : vector<8x8xbf16>, vector<8x128xbf16>, vector<8x128xf32> -> vector<8x128xf32>
      %194 = arith.addf %191, %193 : vector<8x128xf32>
      scf.yield %180, %189, %194 : vector<8x1xf32>, vector<8x1xf32>, vector<8x128xf32>
    }
    %25 = arith.index_cast %4 : i32 to index
    %c0_10 = arith.constant 0 : index
    %26 = vector.load %arg10[%25, %c0_10] : memref<8x1024xbf16, #tpu.memory_space<vmem>>, vector<8x128xbf16>
    %27 = arith.index_cast %4 : i32 to index
    %c512 = arith.constant 512 : index
    %28 = vector.load %arg10[%27, %c512] : memref<8x1024xbf16, #tpu.memory_space<vmem>>, vector<8x128xbf16>
    %cst_11 = arith.constant dense<0.000000e+00> : vector<8x8xf32>
    %29 = tpu.matmul %18, %26, %cst_11 {dimension_numbers = #tpu.dot_dimension_numbers<[1], [1], [0], [0], [0, 0, 1, 0], [], []>} : vector<8x128xbf16>, vector<8x128xbf16>, vector<8x8xf32> -> vector<8x8xf32>
    %cst_12 = arith.constant -1.000000e+05 : f32
    %30 = vector.broadcast %cst_12 : f32 to vector<8x8xf32>
    %31 = arith.select %17, %29, %30 : vector<8x8xi1>, vector<8x8xf32>
    %cst_13 = arith.constant dense<0xFF800000> : vector<8xf32>
    %32 = vector.multi_reduction <maximumf>, %31, %cst_13 [1] : vector<8x8xf32> to vector<8xf32>
    %33 = vector.shape_cast %32 : vector<8xf32> to vector<8x1xf32>
    %34 = arith.maximumf %24#0, %33 : vector<8x1xf32>
    %35 = arith.subf %24#0, %34 : vector<8x1xf32>
    %36 = math.exp %35 : vector<8x1xf32>
    %37 = vector.broadcast %34 : vector<8x1xf32> to vector<8x8xf32>
    %38 = arith.subf %31, %37 : vector<8x8xf32>
    %39 = math.exp %38 : vector<8x8xf32>
    %40 = arith.mulf %36, %24#1 : vector<8x1xf32>
    %cst_14 = arith.constant dense<0.000000e+00> : vector<8xf32>
    %41 = vector.multi_reduction <add>, %39, %cst_14 [1] : vector<8x8xf32> to vector<8xf32>
    %42 = vector.shape_cast %41 : vector<8xf32> to vector<8x1xf32>
    %43 = arith.addf %40, %42 : vector<8x1xf32>
    %44 = vector.broadcast %36 : vector<8x1xf32> to vector<8x128xf32>
    %45 = arith.mulf %44, %24#2 : vector<8x128xf32>
    %46 = arith.truncf %39 : vector<8x8xf32> to vector<8x8xbf16>
    %cst_15 = arith.constant dense<0.000000e+00> : vector<8x128xf32>
    %47 = tpu.matmul %46, %28, %cst_15 {dimension_numbers = #tpu.dot_dimension_numbers<[1], [0], [0], [1], [0, 0, 1, 1], [], []>} : vector<8x8xbf16>, vector<8x128xbf16>, vector<8x128xf32> -> vector<8x128xf32>
    %48 = arith.addf %45, %47 : vector<8x128xf32>
    %49 = tpu.reciprocal %43 {approx = true} : vector<8x1xf32> -> vector<8x1xf32>
    %50 = vector.broadcast %49 : vector<8x1xf32> to vector<8x128xf32>
    %51 = arith.mulf %48, %50 : vector<8x128xf32>
    %52 = arith.truncf %51 : vector<8x128xf32> to vector<8x128xbf16>
    %c0_16 = arith.constant 0 : index
    %c0_17 = arith.constant 0 : index
    %53 = vector.load %arg11[%c0_16, %c0_17] : memref<8x512xbf16, #tpu.memory_space<vmem>>, vector<8x128xbf16>
    tpu.vector_store %arg11[%c0_16, %c0_17], %52 {strides = array<i32>} : memref<8x512xbf16, #tpu.memory_space<vmem>>, vector<8x128xbf16>,
    %54 = vector.extract_strided_slice %14 {offsets = [0, 128], sizes = [8, 128], strides = [1, 1]} : vector<8x512xbf16> to vector<8x128xbf16>
    %cst_18 = arith.constant 0xFF800000 : f32
    %55 = vector.broadcast %cst_18 : f32 to vector<8x1xf32>
    %cst_19 = arith.constant 0.000000e+00 : f32
    %56 = vector.broadcast %cst_19 : f32 to vector<8x1xf32>
    %cst_20 = arith.constant 0.000000e+00 : f32
    %57 = vector.broadcast %cst_20 : f32 to vector<8x128xf32>
    %c0_i32_21 = arith.constant 0 : i32
    %58 = arith.subi %arg1, %c0_i32_21 : i32
    %59 = arith.addi %c0_i32_21, %58 : i32
    %c1_i32_22 = arith.constant 1 : i32
    %60:3 = scf.for %arg12 = %c0_i32_21 to %59 step %c1_i32_22 iter_args(%arg13 = %55, %arg14 = %56, %arg15 = %57) -> (vector<8x1xf32>, vector<8x1xf32>, vector<8x128xf32>)  : i32 {
      %c8_i32_64 = arith.constant 8 : i32
      %171 = arith.muli %arg12, %c8_i32_64 : i32
      %172 = tpu.assume_multiple %171, 8 : i32
      %173 = arith.index_cast %172 : i32 to index
      %c128_65 = arith.constant 128 : index
      %174 = vector.load %arg10[%173, %c128_65] : memref<8x1024xbf16, #tpu.memory_space<vmem>>, vector<8x128xbf16>
      %175 = arith.index_cast %172 : i32 to index
      %c640_66 = arith.constant 640 : index
      %176 = vector.load %arg10[%175, %c640_66] : memref<8x1024xbf16, #tpu.memory_space<vmem>>, vector<8x128xbf16>
      %cst_67 = arith.constant dense<0.000000e+00> : vector<8x8xf32>
      %177 = tpu.matmul %54, %174, %cst_67 {dimension_numbers = #tpu.dot_dimension_numbers<[1], [1], [0], [0], [0, 0, 1, 0], [], []>} : vector<8x128xbf16>, vector<8x128xbf16>, vector<8x8xf32> -> vector<8x8xf32>
      %cst_68 = arith.constant dense<0xFF800000> : vector<8xf32>
      %178 = vector.multi_reduction <maximumf>, %177, %cst_68 [1] : vector<8x8xf32> to vector<8xf32>
      %179 = vector.shape_cast %178 : vector<8xf32> to vector<8x1xf32>
      %180 = arith.maximumf %arg13, %179 : vector<8x1xf32>
      %181 = arith.subf %arg13, %180 : vector<8x1xf32>
      %182 = math.exp %181 : vector<8x1xf32>
      %183 = vector.broadcast %180 : vector<8x1xf32> to vector<8x8xf32>
      %184 = arith.subf %177, %183 : vector<8x8xf32>
      %185 = math.exp %184 : vector<8x8xf32>
      %186 = arith.mulf %182, %arg14 : vector<8x1xf32>
      %cst_69 = arith.constant dense<0.000000e+00> : vector<8xf32>
      %187 = vector.multi_reduction <add>, %185, %cst_69 [1] : vector<8x8xf32> to vector<8xf32>
      %188 = vector.shape_cast %187 : vector<8xf32> to vector<8x1xf32>
      %189 = arith.addf %186, %188 : vector<8x1xf32>
      %190 = vector.broadcast %182 : vector<8x1xf32> to vector<8x128xf32>
      %191 = arith.mulf %190, %arg15 : vector<8x128xf32>
      %192 = arith.truncf %185 : vector<8x8xf32> to vector<8x8xbf16>
      %cst_70 = arith.constant dense<0.000000e+00> : vector<8x128xf32>
      %193 = tpu.matmul %192, %176, %cst_70 {dimension_numbers = #tpu.dot_dimension_numbers<[1], [0], [0], [1], [0, 0, 1, 1], [], []>} : vector<8x8xbf16>, vector<8x128xbf16>, vector<8x128xf32> -> vector<8x128xf32>
      %194 = arith.addf %191, %193 : vector<8x128xf32>
      scf.yield %180, %189, %194 : vector<8x1xf32>, vector<8x1xf32>, vector<8x128xf32>
    }
    %61 = arith.index_cast %4 : i32 to index
    %c128 = arith.constant 128 : index
    %62 = vector.load %arg10[%61, %c128] : memref<8x1024xbf16, #tpu.memory_space<vmem>>, vector<8x128xbf16>
    %63 = arith.index_cast %4 : i32 to index
    %c640 = arith.constant 640 : index
    %64 = vector.load %arg10[%63, %c640] : memref<8x1024xbf16, #tpu.memory_space<vmem>>, vector<8x128xbf16>
    %cst_23 = arith.constant dense<0.000000e+00> : vector<8x8xf32>
    %65 = tpu.matmul %54, %62, %cst_23 {dimension_numbers = #tpu.dot_dimension_numbers<[1], [1], [0], [0], [0, 0, 1, 0], [], []>} : vector<8x128xbf16>, vector<8x128xbf16>, vector<8x8xf32> -> vector<8x8xf32>
    %cst_24 = arith.constant -1.000000e+05 : f32
    %66 = vector.broadcast %cst_24 : f32 to vector<8x8xf32>
    %67 = arith.select %17, %65, %66 : vector<8x8xi1>, vector<8x8xf32>
    %cst_25 = arith.constant dense<0xFF800000> : vector<8xf32>
    %68 = vector.multi_reduction <maximumf>, %67, %cst_25 [1] : vector<8x8xf32> to vector<8xf32>
    %69 = vector.shape_cast %68 : vector<8xf32> to vector<8x1xf32>
    %70 = arith.maximumf %60#0, %69 : vector<8x1xf32>
    %71 = arith.subf %60#0, %70 : vector<8x1xf32>
    %72 = math.exp %71 : vector<8x1xf32>
    %73 = vector.broadcast %70 : vector<8x1xf32> to vector<8x8xf32>
    %74 = arith.subf %67, %73 : vector<8x8xf32>
    %75 = math.exp %74 : vector<8x8xf32>
    %76 = arith.mulf %72, %60#1 : vector<8x1xf32>
    %cst_26 = arith.constant dense<0.000000e+00> : vector<8xf32>
    %77 = vector.multi_reduction <add>, %75, %cst_26 [1] : vector<8x8xf32> to vector<8xf32>
    %78 = vector.shape_cast %77 : vector<8xf32> to vector<8x1xf32>
    %79 = arith.addf %76, %78 : vector<8x1xf32>
    %80 = vector.broadcast %72 : vector<8x1xf32> to vector<8x128xf32>
    %81 = arith.mulf %80, %60#2 : vector<8x128xf32>
    %82 = arith.truncf %75 : vector<8x8xf32> to vector<8x8xbf16>
    %cst_27 = arith.constant dense<0.000000e+00> : vector<8x128xf32>
    %83 = tpu.matmul %82, %64, %cst_27 {dimension_numbers = #tpu.dot_dimension_numbers<[1], [0], [0], [1], [0, 0, 1, 1], [], []>} : vector<8x8xbf16>, vector<8x128xbf16>, vector<8x128xf32> -> vector<8x128xf32>
    %84 = arith.addf %81, %83 : vector<8x128xf32>
    %85 = tpu.reciprocal %79 {approx = true} : vector<8x1xf32> -> vector<8x1xf32>
    %86 = vector.broadcast %85 : vector<8x1xf32> to vector<8x128xf32>
    %87 = arith.mulf %84, %86 : vector<8x128xf32>
    %88 = arith.truncf %87 : vector<8x128xf32> to vector<8x128xbf16>
    %c0_28 = arith.constant 0 : index
    %c128_29 = arith.constant 128 : index
    %89 = vector.load %arg11[%c0_28, %c128_29] : memref<8x512xbf16, #tpu.memory_space<vmem>>, vector<8x128xbf16>
    tpu.vector_store %arg11[%c0_28, %c128_29], %88 {strides = array<i32>} : memref<8x512xbf16, #tpu.memory_space<vmem>>, vector<8x128xbf16>,
    %90 = vector.extract_strided_slice %14 {offsets = [0, 256], sizes = [8, 128], strides = [1, 1]} : vector<8x512xbf16> to vector<8x128xbf16>
    %cst_30 = arith.constant 0xFF800000 : f32
    %91 = vector.broadcast %cst_30 : f32 to vector<8x1xf32>
    %cst_31 = arith.constant 0.000000e+00 : f32
    %92 = vector.broadcast %cst_31 : f32 to vector<8x1xf32>
    %cst_32 = arith.constant 0.000000e+00 : f32
    %93 = vector.broadcast %cst_32 : f32 to vector<8x128xf32>
    %c0_i32_33 = arith.constant 0 : i32
    %94 = arith.subi %arg1, %c0_i32_33 : i32
    %95 = arith.addi %c0_i32_33, %94 : i32
    %c1_i32_34 = arith.constant 1 : i32
    %96:3 = scf.for %arg12 = %c0_i32_33 to %95 step %c1_i32_34 iter_args(%arg13 = %91, %arg14 = %92, %arg15 = %93) -> (vector<8x1xf32>, vector<8x1xf32>, vector<8x128xf32>)  : i32 {
      %c8_i32_64 = arith.constant 8 : i32
      %171 = arith.muli %arg12, %c8_i32_64 : i32
      %172 = tpu.assume_multiple %171, 8 : i32
      %173 = arith.index_cast %172 : i32 to index
      %c256_65 = arith.constant 256 : index
      %174 = vector.load %arg10[%173, %c256_65] : memref<8x1024xbf16, #tpu.memory_space<vmem>>, vector<8x128xbf16>
      %175 = arith.index_cast %172 : i32 to index
      %c768_66 = arith.constant 768 : index
      %176 = vector.load %arg10[%175, %c768_66] : memref<8x1024xbf16, #tpu.memory_space<vmem>>, vector<8x128xbf16>
      %cst_67 = arith.constant dense<0.000000e+00> : vector<8x8xf32>
      %177 = tpu.matmul %90, %174, %cst_67 {dimension_numbers = #tpu.dot_dimension_numbers<[1], [1], [0], [0], [0, 0, 1, 0], [], []>} : vector<8x128xbf16>, vector<8x128xbf16>, vector<8x8xf32> -> vector<8x8xf32>
      %cst_68 = arith.constant dense<0xFF800000> : vector<8xf32>
      %178 = vector.multi_reduction <maximumf>, %177, %cst_68 [1] : vector<8x8xf32> to vector<8xf32>
      %179 = vector.shape_cast %178 : vector<8xf32> to vector<8x1xf32>
      %180 = arith.maximumf %arg13, %179 : vector<8x1xf32>
      %181 = arith.subf %arg13, %180 : vector<8x1xf32>
      %182 = math.exp %181 : vector<8x1xf32>
      %183 = vector.broadcast %180 : vector<8x1xf32> to vector<8x8xf32>
      %184 = arith.subf %177, %183 : vector<8x8xf32>
      %185 = math.exp %184 : vector<8x8xf32>
      %186 = arith.mulf %182, %arg14 : vector<8x1xf32>
      %cst_69 = arith.constant dense<0.000000e+00> : vector<8xf32>
      %187 = vector.multi_reduction <add>, %185, %cst_69 [1] : vector<8x8xf32> to vector<8xf32>
      %188 = vector.shape_cast %187 : vector<8xf32> to vector<8x1xf32>
      %189 = arith.addf %186, %188 : vector<8x1xf32>
      %190 = vector.broadcast %182 : vector<8x1xf32> to vector<8x128xf32>
      %191 = arith.mulf %190, %arg15 : vector<8x128xf32>
      %192 = arith.truncf %185 : vector<8x8xf32> to vector<8x8xbf16>
      %cst_70 = arith.constant dense<0.000000e+00> : vector<8x128xf32>
      %193 = tpu.matmul %192, %176, %cst_70 {dimension_numbers = #tpu.dot_dimension_numbers<[1], [0], [0], [1], [0, 0, 1, 1], [], []>} : vector<8x8xbf16>, vector<8x128xbf16>, vector<8x128xf32> -> vector<8x128xf32>
      %194 = arith.addf %191, %193 : vector<8x128xf32>
      scf.yield %180, %189, %194 : vector<8x1xf32>, vector<8x1xf32>, vector<8x128xf32>
    }
    %97 = arith.index_cast %4 : i32 to index
    %c256 = arith.constant 256 : index
    %98 = vector.load %arg10[%97, %c256] : memref<8x1024xbf16, #tpu.memory_space<vmem>>, vector<8x128xbf16>
    %99 = arith.index_cast %4 : i32 to index
    %c768 = arith.constant 768 : index
    %100 = vector.load %arg10[%99, %c768] : memref<8x1024xbf16, #tpu.memory_space<vmem>>, vector<8x128xbf16>
    %cst_35 = arith.constant dense<0.000000e+00> : vector<8x8xf32>
    %101 = tpu.matmul %90, %98, %cst_35 {dimension_numbers = #tpu.dot_dimension_numbers<[1], [1], [0], [0], [0, 0, 1, 0], [], []>} : vector<8x128xbf16>, vector<8x128xbf16>, vector<8x8xf32> -> vector<8x8xf32>
    %cst_36 = arith.constant -1.000000e+05 : f32
    %102 = vector.broadcast %cst_36 : f32 to vector<8x8xf32>
    %103 = arith.select %17, %101, %102 : vector<8x8xi1>, vector<8x8xf32>
    %cst_37 = arith.constant dense<0xFF800000> : vector<8xf32>
    %104 = vector.multi_reduction <maximumf>, %103, %cst_37 [1] : vector<8x8xf32> to vector<8xf32>
    %105 = vector.shape_cast %104 : vector<8xf32> to vector<8x1xf32>
    %106 = arith.maximumf %96#0, %105 : vector<8x1xf32>
    %107 = arith.subf %96#0, %106 : vector<8x1xf32>
    %108 = math.exp %107 : vector<8x1xf32>
    %109 = vector.broadcast %106 : vector<8x1xf32> to vector<8x8xf32>
    %110 = arith.subf %103, %109 : vector<8x8xf32>
    %111 = math.exp %110 : vector<8x8xf32>
    %112 = arith.mulf %108, %96#1 : vector<8x1xf32>
    %cst_38 = arith.constant dense<0.000000e+00> : vector<8xf32>
    %113 = vector.multi_reduction <add>, %111, %cst_38 [1] : vector<8x8xf32> to vector<8xf32>
    %114 = vector.shape_cast %113 : vector<8xf32> to vector<8x1xf32>
    %115 = arith.addf %112, %114 : vector<8x1xf32>
    %116 = vector.broadcast %108 : vector<8x1xf32> to vector<8x128xf32>
    %117 = arith.mulf %116, %96#2 : vector<8x128xf32>
    %118 = arith.truncf %111 : vector<8x8xf32> to vector<8x8xbf16>
    %cst_39 = arith.constant dense<0.000000e+00> : vector<8x128xf32>
    %119 = tpu.matmul %118, %100, %cst_39 {dimension_numbers = #tpu.dot_dimension_numbers<[1], [0], [0], [1], [0, 0, 1, 1], [], []>} : vector<8x8xbf16>, vector<8x128xbf16>, vector<8x128xf32> -> vector<8x128xf32>
    %120 = arith.addf %117, %119 : vector<8x128xf32>
    %121 = tpu.reciprocal %115 {approx = true} : vector<8x1xf32> -> vector<8x1xf32>
    %122 = vector.broadcast %121 : vector<8x1xf32> to vector<8x128xf32>
    %123 = arith.mulf %120, %122 : vector<8x128xf32>
    %124 = arith.truncf %123 : vector<8x128xf32> to vector<8x128xbf16>
    %c0_40 = arith.constant 0 : index
    %c256_41 = arith.constant 256 : index
    %125 = vector.load %arg11[%c0_40, %c256_41] : memref<8x512xbf16, #tpu.memory_space<vmem>>, vector<8x128xbf16>
    tpu.vector_store %arg11[%c0_40, %c256_41], %124 {strides = array<i32>} : memref<8x512xbf16, #tpu.memory_space<vmem>>, vector<8x128xbf16>,
    %126 = vector.extract_strided_slice %14 {offsets = [0, 384], sizes = [8, 128], strides = [1, 1]} : vector<8x512xbf16> to vector<8x128xbf16>
    %cst_42 = arith.constant 0xFF800000 : f32
    %127 = vector.broadcast %cst_42 : f32 to vector<8x1xf32>
    %cst_43 = arith.constant 0.000000e+00 : f32
    %128 = vector.broadcast %cst_43 : f32 to vector<8x1xf32>
    %cst_44 = arith.constant 0.000000e+00 : f32
    %129 = vector.broadcast %cst_44 : f32 to vector<8x128xf32>
    %c0_i32_45 = arith.constant 0 : i32
    %130 = arith.subi %arg1, %c0_i32_45 : i32
    %131 = arith.addi %c0_i32_45, %130 : i32
    %c1_i32_46 = arith.constant 1 : i32
    %132:3 = scf.for %arg12 = %c0_i32_45 to %131 step %c1_i32_46 iter_args(%arg13 = %127, %arg14 = %128, %arg15 = %129) -> (vector<8x1xf32>, vector<8x1xf32>, vector<8x128xf32>)  : i32 {
      %c8_i32_64 = arith.constant 8 : i32
      %171 = arith.muli %arg12, %c8_i32_64 : i32
      %172 = tpu.assume_multiple %171, 8 : i32
      %173 = arith.index_cast %172 : i32 to index
      %c384_65 = arith.constant 384 : index
      %174 = vector.load %arg10[%173, %c384_65] : memref<8x1024xbf16, #tpu.memory_space<vmem>>, vector<8x128xbf16>
      %175 = arith.index_cast %172 : i32 to index
      %c896_66 = arith.constant 896 : index
      %176 = vector.load %arg10[%175, %c896_66] : memref<8x1024xbf16, #tpu.memory_space<vmem>>, vector<8x128xbf16>
      %cst_67 = arith.constant dense<0.000000e+00> : vector<8x8xf32>
      %177 = tpu.matmul %126, %174, %cst_67 {dimension_numbers = #tpu.dot_dimension_numbers<[1], [1], [0], [0], [0, 0, 1, 0], [], []>} : vector<8x128xbf16>, vector<8x128xbf16>, vector<8x8xf32> -> vector<8x8xf32>
      %cst_68 = arith.constant dense<0xFF800000> : vector<8xf32>
      %178 = vector.multi_reduction <maximumf>, %177, %cst_68 [1] : vector<8x8xf32> to vector<8xf32>
      %179 = vector.shape_cast %178 : vector<8xf32> to vector<8x1xf32>
      %180 = arith.maximumf %arg13, %179 : vector<8x1xf32>
      %181 = arith.subf %arg13, %180 : vector<8x1xf32>
      %182 = math.exp %181 : vector<8x1xf32>
      %183 = vector.broadcast %180 : vector<8x1xf32> to vector<8x8xf32>
      %184 = arith.subf %177, %183 : vector<8x8xf32>
      %185 = math.exp %184 : vector<8x8xf32>
      %186 = arith.mulf %182, %arg14 : vector<8x1xf32>
      %cst_69 = arith.constant dense<0.000000e+00> : vector<8xf32>
      %187 = vector.multi_reduction <add>, %185, %cst_69 [1] : vector<8x8xf32> to vector<8xf32>
      %188 = vector.shape_cast %187 : vector<8xf32> to vector<8x1xf32>
      %189 = arith.addf %186, %188 : vector<8x1xf32>
      %190 = vector.broadcast %182 : vector<8x1xf32> to vector<8x128xf32>
      %191 = arith.mulf %190, %arg15 : vector<8x128xf32>
      %192 = arith.truncf %185 : vector<8x8xf32> to vector<8x8xbf16>
      %cst_70 = arith.constant dense<0.000000e+00> : vector<8x128xf32>
      %193 = tpu.matmul %192, %176, %cst_70 {dimension_numbers = #tpu.dot_dimension_numbers<[1], [0], [0], [1], [0, 0, 1, 1], [], []>} : vector<8x8xbf16>, vector<8x128xbf16>, vector<8x128xf32> -> vector<8x128xf32>
      %194 = arith.addf %191, %193 : vector<8x128xf32>
      scf.yield %180, %189, %194 : vector<8x1xf32>, vector<8x1xf32>, vector<8x128xf32>
    }
    %133 = arith.index_cast %4 : i32 to index
    %c384 = arith.constant 384 : index
    %134 = vector.load %arg10[%133, %c384] : memref<8x1024xbf16, #tpu.memory_space<vmem>>, vector<8x128xbf16>
    %135 = arith.index_cast %4 : i32 to index
    %c896 = arith.constant 896 : index
    %136 = vector.load %arg10[%135, %c896] : memref<8x1024xbf16, #tpu.memory_space<vmem>>, vector<8x128xbf16>
    %cst_47 = arith.constant dense<0.000000e+00> : vector<8x8xf32>
    %137 = tpu.matmul %126, %134, %cst_47 {dimension_numbers = #tpu.dot_dimension_numbers<[1], [1], [0], [0], [0, 0, 1, 0], [], []>} : vector<8x128xbf16>, vector<8x128xbf16>, vector<8x8xf32> -> vector<8x8xf32>
    %cst_48 = arith.constant -1.000000e+05 : f32
    %138 = vector.broadcast %cst_48 : f32 to vector<8x8xf32>
    %139 = arith.select %17, %137, %138 : vector<8x8xi1>, vector<8x8xf32>
    %cst_49 = arith.constant dense<0xFF800000> : vector<8xf32>
    %140 = vector.multi_reduction <maximumf>, %139, %cst_49 [1] : vector<8x8xf32> to vector<8xf32>
    %141 = vector.shape_cast %140 : vector<8xf32> to vector<8x1xf32>
    %142 = arith.maximumf %132#0, %141 : vector<8x1xf32>
    %143 = arith.subf %132#0, %142 : vector<8x1xf32>
    %144 = math.exp %143 : vector<8x1xf32>
    %145 = vector.broadcast %142 : vector<8x1xf32> to vector<8x8xf32>
    %146 = arith.subf %139, %145 : vector<8x8xf32>
    %147 = math.exp %146 : vector<8x8xf32>
    %148 = arith.mulf %144, %132#1 : vector<8x1xf32>
    %cst_50 = arith.constant dense<0.000000e+00> : vector<8xf32>
    %149 = vector.multi_reduction <add>, %147, %cst_50 [1] : vector<8x8xf32> to vector<8xf32>
    %150 = vector.shape_cast %149 : vector<8xf32> to vector<8x1xf32>
    %151 = arith.addf %148, %150 : vector<8x1xf32>
    %152 = vector.broadcast %144 : vector<8x1xf32> to vector<8x128xf32>
    %153 = arith.mulf %152, %132#2 : vector<8x128xf32>
    %154 = arith.truncf %147 : vector<8x8xf32> to vector<8x8xbf16>
    %cst_51 = arith.constant dense<0.000000e+00> : vector<8x128xf32>
    %155 = tpu.matmul %154, %136, %cst_51 {dimension_numbers = #tpu.dot_dimension_numbers<[1], [0], [0], [1], [0, 0, 1, 1], [], []>} : vector<8x8xbf16>, vector<8x128xbf16>, vector<8x128xf32> -> vector<8x128xf32>
    %156 = arith.addf %153, %155 : vector<8x128xf32>
    %157 = tpu.reciprocal %151 {approx = true} : vector<8x1xf32> -> vector<8x1xf32>
    %158 = vector.broadcast %157 : vector<8x1xf32> to vector<8x128xf32>
    %159 = arith.mulf %156, %158 : vector<8x128xf32>
    %160 = arith.truncf %159 : vector<8x128xf32> to vector<8x128xbf16>
    %c0_52 = arith.constant 0 : index
    %c384_53 = arith.constant 384 : index
    %161 = vector.load %arg11[%c0_52, %c384_53] : memref<8x512xbf16, #tpu.memory_space<vmem>>, vector<8x128xbf16>
    tpu.vector_store %arg11[%c0_52, %c384_53], %160 {strides = array<i32>} : memref<8x512xbf16, #tpu.memory_space<vmem>>, vector<8x128xbf16>,
    %c0_54 = arith.constant 0 : index
    %c0_55 = arith.constant 0 : index
    %162 = vector.load %arg11[%c0_54, %c0_55] : memref<8x512xbf16, #tpu.memory_space<vmem>>, vector<8x512xbf16>
    %c0_56 = arith.constant 0 : index
    %c0_57 = arith.constant 0 : index
    %163 = vector.load %arg5[%c0_56, %c0_57] : memref<512x32xbf16, #tpu.memory_space<vmem>>, vector<512x32xbf16>
    %cst_58 = arith.constant dense<0.000000e+00> : vector<8x32xf32>
    %164 = tpu.matmul %162, %163, %cst_58 {dimension_numbers = #tpu.dot_dimension_numbers<[1], [0], [0], [1], [0, 0, 1, 1], [], []>} : vector<8x512xbf16>, vector<512x32xbf16>, vector<8x32xf32> -> vector<8x32xf32>
    %c0_59 = arith.constant 0 : index
    %c0_60 = arith.constant 0 : index
    %165 = vector.load %arg8[%c0_59, %c0_60] : memref<1x32xf32, #tpu.memory_space<vmem>>, vector<1x32xf32>
    %166 = vector.broadcast %165 : vector<1x32xf32> to vector<8x32xf32>
    %167 = arith.addf %164, %166 : vector<8x32xf32>
    %c0_61 = arith.constant 0 : index
    %c0_62 = arith.constant 0 : index
    %c0_63 = arith.constant 0 : index
    %168 = vector.load %arg9[%c0_61, %c0_62, %c0_63] : memref<1x8x32xf32, #tpu.memory_space<vmem>>, vector<1x8x32xf32>
    %169 = vector.shape_cast %168 : vector<1x8x32xf32> to vector<8x32xf32>
    %170 = vector.shape_cast %167 : vector<8x32xf32> to vector<1x8x32xf32>
    tpu.vector_store %arg9[%c0_61, %c0_62, %c0_63], %170 {strides = array<i32>} : memref<1x8x32xf32, #tpu.memory_space<vmem>>, vector<1x8x32xf32>,
    return
  }
  func.func @transform_0(%arg0: i32, %arg1: i32) -> (i32, i32, i32) {
    %c0_i32 = arith.constant 0 : i32
    %c0_i32_0 = arith.constant 0 : i32
    %c0_i32_1 = arith.constant 0 : i32
    return %arg0, %c0_i32, %c0_i32_0 : i32, i32, i32
  }
  func.func @transform_1(%arg0: i32, %arg1: i32) -> (i32, i32) {
    %c0_i32 = arith.constant 0 : i32
    %c0_i32_0 = arith.constant 0 : i32
    %c0_i32_1 = arith.constant 0 : i32
    return %c0_i32, %c0_i32_0 : i32, i32
  }
  func.func @transform_2(%arg0: i32, %arg1: i32) -> (i32, i32) {
    %c0_i32 = arith.constant 0 : i32
    %c0_i32_0 = arith.constant 0 : i32
    %c0_i32_1 = arith.constant 0 : i32
    return %c0_i32, %c0_i32_0 : i32, i32
  }
  func.func @transform_3(%arg0: i32, %arg1: i32) -> (i32, i32) {
    %c0_i32 = arith.constant 0 : i32
    %c0_i32_0 = arith.constant 0 : i32
    %c0_i32_1 = arith.constant 0 : i32
    return %c0_i32, %c0_i32_0 : i32, i32
  }
  func.func @transform_4(%arg0: i32, %arg1: i32) -> (i32, i32) {
    %c0_i32 = arith.constant 0 : i32
    %c0_i32_0 = arith.constant 0 : i32
    %c0_i32_1 = arith.constant 0 : i32
    return %c0_i32, %c0_i32_0 : i32, i32
  }
  func.func @transform_5(%arg0: i32, %arg1: i32) -> (i32, i32) {
    %c0_i32 = arith.constant 0 : i32
    %c0_i32_0 = arith.constant 0 : i32
    %c0_i32_1 = arith.constant 0 : i32
    return %c0_i32, %c0_i32_0 : i32, i32
  }
  func.func @transform_6(%arg0: i32, %arg1: i32) -> (i32, i32) {
    %c0_i32 = arith.constant 0 : i32
    %c0_i32_0 = arith.constant 0 : i32
    %c0_i32_1 = arith.constant 0 : i32
    return %c0_i32, %c0_i32_0 : i32, i32
  }
  func.func @transform_7(%arg0: i32, %arg1: i32) -> (i32, i32, i32) {
    %c0_i32 = arith.constant 0 : i32
    %c0_i32_0 = arith.constant 0 : i32
    return %arg0, %arg1, %c0_i32 : i32, i32, i32
  }
}

</mosaic_0001>

<llo_original>
// kernel: tpu_custom_call.1
$region0: #{tpu_custom_call.1}
  #allocation0 [shape = 'u32[]', space=smem, size = 0x4, offset = 0x4, fixed_abs, tag = 'smem constant byte address 0x4 - core index']
  #allocation1 [shape = 'u32[144,128]{1,0:T(1,128)}', space=vmem, size = 0x12000, scoped, tag = 'internal scratch']
  #allocation2 [shape = 'bf16[8,1024]{1,0:T(8,128)(2,1)}', space=vmem, size = 0x4000, scoped, tag = 'scratch operand']
  #allocation3 [shape = 'bf16[8,512]{1,0:T(8,128)(2,1)}', space=vmem, size = 0x2000, scoped, tag = 'scratch operand']
  %s0 = inlined_call_operand.vmem [shape: f32[2,8,32], index: 0, kind: input, shape index: {}]
  %s1 = inlined_call_operand.vmem [shape: bf16[32,512], index: 1, kind: input, shape index: {}]
  %s2 = inlined_call_operand.vmem [shape: bf16[32,1024], index: 2, kind: input, shape index: {}]
  %s3 = inlined_call_operand.vmem [shape: bf16[512,32], index: 3, kind: input, shape index: {}]
  %s4 = inlined_call_operand.vmem [shape: f32[1,512], index: 4, kind: input, shape index: {}]
  %s5 = inlined_call_operand.vmem [shape: f32[1,1024], index: 5, kind: input, shape index: {}]
  %s6 = inlined_call_operand.vmem [shape: f32[1,32], index: 6, kind: input, shape index: {}]
  %s7 = inlined_call_operand.hbm [shape: f32[2,8,32], index: 7, kind: output, shape index: {}]
  %s8 = sld [smem:[#allocation0]]
  $region93: #{tpu_custom_call.1} parent=0
    _
  %s10 = ssub.s32 1, %s8
  %s11 = scalar_select 0, %s10, %s8
  $region1: #{tpu_custom_call.1} parent=0
    #allocation4 [shape = 'u8[8192]{0}', space=vmem, size = 0x2000, scoped, tag = 'output window, operand 0']
    #allocation5 [shape = 's32[2]{0}', space=sflag, size = 0x8, scoped, tag = 'scoped memory for tpu_custom_call.1']
    %12 = vsyncpa [#allocation5], 0
    %s13 = scalar_lea.sflag [#allocation5], 1
    %14 = vsyncpa %s13, 0
    loop: start=0, step=1, limit=4
    $region2: #{tpu_custom_call.1} parent=1 // loop_pre_header
      _
    $region3: #{tpu_custom_call.1} parent=1 // loop_header
      %s16 = sphi 0, %s20
      %p17 = scmp.ge.s32.totalorder %s16, 4
      %s23 = sphi 0, %s35
      %s24 = sphi 0, %s31
      %s25 = sphi 0, %s23
      %s26 = sphi 0, %s24
      %s27 = sphi 0, %s25
      %s28 = sphi 0, %s26
      %s38 = sphi 0, %s40
      %s41 = sphi 0, %s38
      %s42 = sphi 0, %s41
      %s58 = sphi 0, %s42
      %s62 = sphi 0, %s62
      %s64 = sphi 0, %s62
      %s65 = sphi 0, %s64
      %s79 = sphi 0, %s65
      %s83 = sphi 0, %s83
      %s85 = sphi 0, %s83
      %s86 = sphi 0, %s85
      %s100 = sphi 0, %s86
      %s104 = sphi 0, %s104
      %s106 = sphi 0, %s104
      %s107 = sphi 0, %s106
      %s121 = sphi 0, %s107
      %s125 = sphi 0, %s125
      %s127 = sphi 0, %s125
      %s128 = sphi 0, %s127
      %s142 = sphi 0, %s128
      %s146 = sphi 0, %s146
      %s148 = sphi 0, %s146
      %s149 = sphi 0, %s148
      %s163 = sphi 0, %s149
      %s167 = sphi 0, %s167
      %s169 = sphi 0, %s167
      %s170 = sphi 0, %s169
      %s184 = sphi 0, %s170
      %s192 = sphi 0, %s194
      %s195 = sphi 0, %s192
      %s196 = sphi 0, %s195
      %s212 = sphi 0, %s196
    $region4: #{tpu_custom_call.1} parent=1 // loop_header_branch
      %19 = sbr.rel (%p17) target = $region8
    $region5: #{tpu_custom_call.1} parent=1 // loop_body
      %s21 = ssub.s32 %s16, 1
      %s22 = ssub.s32 %s16, 2
      %s29 = sadd.s32 1, %s24
      %p30 = scmp.ge.s32.totalorder %s29, 1
      %s31 = scalar_select %p30, 0, %s29
      %s32 = sadd.s32 1, %s23
      %s33 = scalar_select %p30, %s32, %s23
      %p34 = scmp.ge.s32.totalorder %s33, 2
      %s35 = scalar_select %p34, 0, %s33
      %s36 = ssub.s32 %s23, %s35
      %p37 = scmp.eq.s32.totalorder %s36, 0
      %s39 = sadd.s32 %s38, 1
      %s40 = scalar_select %p37, %s38, %s39
      %p43 = pneg %p37
      %p44 = scmp.eq.s32.totalorder %s16, 1
      %p45 = por %p43, %p44
      %p46 = scmp.ne.s32.totalorder %s38, %s41
      %p47 = scmp.eq.s32.totalorder %s16, 0
      %p48 = por %p46, %p47
      %p49 = scmp.ne.s32.totalorder %s38, %s41
      %p50 = scmp.eq.s32.totalorder %s21, 1
      %p51 = por %p49, %p50
      %p52 = scmp.ne.s32.totalorder %s41, %s42
      %p53 = scmp.eq.s32.totalorder %s21, 0
      %p54 = por %p52, %p53
      %p55 = scmp.ne.s32.totalorder %s41, %s42
      %p56 = scmp.eq.s32.totalorder %s22, 1
      %p57 = por %p55, %p56
      %p59 = scmp.ne.s32.totalorder %s42, %s58
      %p60 = scmp.eq.s32.totalorder %s22, 0
      %p61 = por %p59, %p60
      %s63 = sadd.s32 %s62, 1
      %p66 = scmp.eq.s32.totalorder %s16, 1
      %p67 = scmp.ne.s32.totalorder %s62, %s64
      %p68 = scmp.eq.s32.totalorder %s16, 0
      %p69 = por %p67, %p68
      %p70 = scmp.ne.s32.totalorder %s62, %s64
      %p71 = scmp.eq.s32.totalorder %s21, 1
      %p72 = por %p70, %p71
      %p73 = scmp.ne.s32.totalorder %s64, %s65
      %p74 = scmp.eq.s32.totalorder %s21, 0
      %p75 = por %p73, %p74
      %p76 = scmp.ne.s32.totalorder %s64, %s65
      %p77 = scmp.eq.s32.totalorder %s22, 1
      %p78 = por %p76, %p77
      %p80 = scmp.ne.s32.totalorder %s65, %s79
      %p81 = scmp.eq.s32.totalorder %s22, 0
      %p82 = por %p80, %p81
      %s84 = sadd.s32 %s83, 1
      %p87 = scmp.eq.s32.totalorder %s16, 1
      %p88 = scmp.ne.s32.totalorder %s83, %s85
      %p89 = scmp.eq.s32.totalorder %s16, 0
      %p90 = por %p88, %p89
      %p91 = scmp.ne.s32.totalorder %s83, %s85
      %p92 = scmp.eq.s32.totalorder %s21, 1
      %p93 = por %p91, %p92
      %p94 = scmp.ne.s32.totalorder %s85, %s86
      %p95 = scmp.eq.s32.totalorder %s21, 0
      %p96 = por %p94, %p95
      %p97 = scmp.ne.s32.totalorder %s85, %s86
      %p98 = scmp.eq.s32.totalorder %s22, 1
      %p99 = por %p97, %p98
      %p101 = scmp.ne.s32.totalorder %s86, %s100
      %p102 = scmp.eq.s32.totalorder %s22, 0
      %p103 = por %p101, %p102
      %s105 = sadd.s32 %s104, 1
      %p108 = scmp.eq.s32.totalorder %s16, 1
      %p109 = scmp.ne.s32.totalorder %s104, %s106
      %p110 = scmp.eq.s32.totalorder %s16, 0
      %p111 = por %p109, %p110
      %p112 = scmp.ne.s32.totalorder %s104, %s106
      %p113 = scmp.eq.s32.totalorder %s21, 1
      %p114 = por %p112, %p113
      %p115 = scmp.ne.s32.totalorder %s106, %s107
      %p116 = scmp.eq.s32.totalorder %s21, 0
      %p117 = por %p115, %p116
      %p118 = scmp.ne.s32.totalorder %s106, %s107
      %p119 = scmp.eq.s32.totalorder %s22, 1
      %p120 = por %p118, %p119
      %p122 = scmp.ne.s32.totalorder %s107, %s121
      %p123 = scmp.eq.s32.totalorder %s22, 0
      %p124 = por %p122, %p123
      %s126 = sadd.s32 %s125, 1
      %p129 = scmp.eq.s32.totalorder %s16, 1
      %p130 = scmp.ne.s32.totalorder %s125, %s127
      %p131 = scmp.eq.s32.totalorder %s16, 0
      %p132 = por %p130, %p131
      %p133 = scmp.ne.s32.totalorder %s125, %s127
      %p134 = scmp.eq.s32.totalorder %s21, 1
      %p135 = por %p133, %p134
      %p136 = scmp.ne.s32.totalorder %s127, %s128
      %p137 = scmp.eq.s32.totalorder %s21, 0
      %p138 = por %p136, %p137
      %p139 = scmp.ne.s32.totalorder %s127, %s128
      %p140 = scmp.eq.s32.totalorder %s22, 1
      %p141 = por %p139, %p140
      %p143 = scmp.ne.s32.totalorder %s128, %s142
      %p144 = scmp.eq.s32.totalorder %s22, 0
      %p145 = por %p143, %p144
      %s147 = sadd.s32 %s146, 1
      %p150 = scmp.eq.s32.totalorder %s16, 1
      %p151 = scmp.ne.s32.totalorder %s146, %s148
      %p152 = scmp.eq.s32.totalorder %s16, 0
      %p153 = por %p151, %p152
      %p154 = scmp.ne.s32.totalorder %s146, %s148
      %p155 = scmp.eq.s32.totalorder %s21, 1
      %p156 = por %p154, %p155
      %p157 = scmp.ne.s32.totalorder %s148, %s149
      %p158 = scmp.eq.s32.totalorder %s21, 0
      %p159 = por %p157, %p158
      %p160 = scmp.ne.s32.totalorder %s148, %s149
      %p161 = scmp.eq.s32.totalorder %s22, 1
      %p162 = por %p160, %p161
      %p164 = scmp.ne.s32.totalorder %s149, %s163
      %p165 = scmp.eq.s32.totalorder %s22, 0
      %p166 = por %p164, %p165
      %s168 = sadd.s32 %s167, 1
      %p171 = scmp.eq.s32.totalorder %s16, 1
      %p172 = scmp.ne.s32.totalorder %s167, %s169
      %p173 = scmp.eq.s32.totalorder %s16, 0
      %p174 = por %p172, %p173
      %p175 = scmp.ne.s32.totalorder %s167, %s169
      %p176 = scmp.eq.s32.totalorder %s21, 1
      %p177 = por %p175, %p176
      %p178 = scmp.ne.s32.totalorder %s169, %s170
      %p179 = scmp.eq.s32.totalorder %s21, 0
      %p180 = por %p178, %p179
      %p181 = scmp.ne.s32.totalorder %s169, %s170
      %p182 = scmp.eq.s32.totalorder %s22, 1
      %p183 = por %p181, %p182
      %p185 = scmp.ne.s32.totalorder %s170, %s184
      %p186 = scmp.eq.s32.totalorder %s22, 0
      %p187 = por %p185, %p186
      %s188 = ssub.s32 %s23, %s35
      %s189 = ssub.s32 %s24, %s31
      %s190 = sor.u32 %s188, %s189
      %p191 = scmp.eq.s32.totalorder %s190, 0
      %s193 = sadd.s32 %s192, 1
      %s194 = scalar_select %p191, %s192, %s193
      %p197 = pneg %p191
      %p198 = scmp.eq.s32.totalorder %s16, 1
      %p199 = por %p197, %p198
      %p200 = scmp.ne.s32.totalorder %s192, %s195
      %p201 = scmp.eq.s32.totalorder %s16, 0
      %p202 = por %p200, %p201
      %p203 = scmp.ne.s32.totalorder %s192, %s195
      %p204 = scmp.eq.s32.totalorder %s21, 1
      %p205 = por %p203, %p204
      %p206 = scmp.ne.s32.totalorder %s195, %s196
      %p207 = scmp.eq.s32.totalorder %s21, 0
      %p208 = por %p206, %p207
      %p209 = scmp.ne.s32.totalorder %s195, %s196
      %p210 = scmp.eq.s32.totalorder %s22, 1
      %p211 = por %p209, %p210
      %p213 = scmp.ne.s32.totalorder %s196, %s212
      %p214 = scmp.eq.s32.totalorder %s22, 0
      %p215 = por %p213, %p214
      %p216 = scmp.le.s32.totalorder 1, %s16
      %p217 = scmp.lt.s32.totalorder %s16, 3
      %p218 = pnand %p216, %p217
      %p219 = pneg %p218
      // Predicated region
      $region9: #{tpu_custom_call.1} parent=5 // pred_check
        _
      $region10: #{tpu_custom_call.1} parent=5 // pred_check_branch
        %221 = sbr.rel (%p218) target = $region12
      $region11: #{tpu_custom_call.1} parent=5 // pred_region
        %s222 = ssub.s32 %s16, 1
        // Predicated region
        $region13: #{tpu_custom_call.1} parent=11 // pred_check
          %p223 = pneg %p75
        $region14: #{tpu_custom_call.1} parent=11 // pred_check_branch
          %225 = sbr.rel (%p223) target = $region16
        $region15: #{tpu_custom_call.1} parent=11 // pred_region
          _
        $region16: #{tpu_custom_call.1} parent=11 // pred_fallthru
          _
        // Predicated region
        $region17: #{tpu_custom_call.1} parent=11 // pred_check
          %p226 = pneg %p96
        $region18: #{tpu_custom_call.1} parent=11 // pred_check_branch
          %228 = sbr.rel (%p226) target = $region20
        $region19: #{tpu_custom_call.1} parent=11 // pred_region
          _
        $region20: #{tpu_custom_call.1} parent=11 // pred_fallthru
          _
        // Predicated region
        $region21: #{tpu_custom_call.1} parent=11 // pred_check
          %p229 = pneg %p117
        $region22: #{tpu_custom_call.1} parent=11 // pred_check_branch
          %231 = sbr.rel (%p229) target = $region24
        $region23: #{tpu_custom_call.1} parent=11 // pred_region
          _
        $region24: #{tpu_custom_call.1} parent=11 // pred_fallthru
          _
        // Predicated region
        $region25: #{tpu_custom_call.1} parent=11 // pred_check
          %p232 = pneg %p138
        $region26: #{tpu_custom_call.1} parent=11 // pred_check_branch
          %234 = sbr.rel (%p232) target = $region28
        $region27: #{tpu_custom_call.1} parent=11 // pred_region
          _
        $region28: #{tpu_custom_call.1} parent=11 // pred_fallthru
          _
        // Predicated region
        $region29: #{tpu_custom_call.1} parent=11 // pred_check
          %p235 = pneg %p159
        $region30: #{tpu_custom_call.1} parent=11 // pred_check_branch
          %237 = sbr.rel (%p235) target = $region32
        $region31: #{tpu_custom_call.1} parent=11 // pred_region
          _
        $region32: #{tpu_custom_call.1} parent=11 // pred_fallthru
          _
        // Predicated region
        $region33: #{tpu_custom_call.1} parent=11 // pred_check
          %p238 = pneg %p180
        $region34: #{tpu_custom_call.1} parent=11 // pred_check_branch
          %240 = sbr.rel (%p238) target = $region36
        $region35: #{tpu_custom_call.1} parent=11 // pred_region
          _
        $region36: #{tpu_custom_call.1} parent=11 // pred_fallthru
          _
      $region12: #{tpu_custom_call.1} parent=5 // pred_fallthru
        _
      %p241 = scmp.lt.s32.totalorder %s16, 2
      // Predicated region
      $region37: #{tpu_custom_call.1} parent=5 // pred_check
        %p242 = pneg %p241
      $region38: #{tpu_custom_call.1} parent=5 // pred_check_branch
        %244 = sbr.rel (%p242) target = $region40
      $region39: #{tpu_custom_call.1} parent=5 // pred_region
        // Predicated region
        $region41: #{tpu_custom_call.1} parent=39 // pred_check
          %p245 = pneg %p48
        $region42: #{tpu_custom_call.1} parent=39 // pred_check_branch
          %247 = sbr.rel (%p245) target = $region44
        $region43: #{tpu_custom_call.1} parent=39 // pred_region
          %p248 = scmp.lt.s32.totalorder %s23, 1
          %s249 = scalar_select %p248, %s23, 1
          %s250 = smul.addr %s249, 8
          %s251 = scalar_lea.vmem %s0, %s250
        $region44: #{tpu_custom_call.1} parent=39 // pred_fallthru
          _
      $region40: #{tpu_custom_call.1} parent=5 // pred_fallthru
        _
      %p252 = scmp.le.s32.totalorder 1, %s16
      %p253 = scmp.lt.s32.totalorder %s16, 3
      %p254 = pnand %p252, %p253
      %p255 = pneg %p254
      // Predicated region
      $region45: #{tpu_custom_call.1} parent=5 // pred_check
        _
      $region46: #{tpu_custom_call.1} parent=5 // pred_check_branch
        %257 = sbr.rel (%p254) target = $region48
      $region47: #{tpu_custom_call.1} parent=5 // pred_region
        %s258 = ssub.s32 %s16, 1
        %p259 = scmp.lt.s32.totalorder %s25, 1
        %s260 = scalar_select %p259, %s25, 1
        %s261 = smul.addr %s260, 8
        %s262 = scalar_lea.vmem %s0, %s261
        %p263 = pneg %p54
        %p264 = pneg %p51
        %p265 = pneg %p75
        %p266 = pneg %p72
        %p267 = pneg %p96
        %p268 = pneg %p93
        %p269 = pneg %p117
        %p270 = pneg %p114
        %p271 = pneg %p138
        %p272 = pneg %p135
        %p273 = pneg %p159
        %p274 = pneg %p156
        %p275 = pneg %p180
        %p276 = pneg %p177
        %p277 = pneg %p208
        %p278 = pneg %p205
        %s279 = sand.u32 %s195, 1
        %s280 = scalar_lea.sflag [#allocation5], %s279
        %s281 = sand.u32 %s195, 1
        %s282 = smul.addr %s281, 8
        %s283 = scalar_lea.vmem [#allocation4], %s282
        %p284 = scmp.lt.s32.totalorder %s25, 1
        %s285 = scalar_select %p284, %s25, 1
        %s286 = smul.addr %s285, 8
        %s287 = scalar_lea.vmem %s0, %s286
        %p289 = scmp.eq.s32.totalorder %s26, 0
        // Predicated region
        $region49: #{tpu_custom_call.1} parent=47 // pred_check
          %p290 = pneg %p289
        $region50: #{tpu_custom_call.1} parent=47 // pred_check_branch
          %292 = sbr.rel (%p290) target = $region52
        $region51: #{tpu_custom_call.1} parent=47 // pred_region
          %v293 = vld [vmem:[%s2] sm:$0xff]
          %v294 = vld [vmem:[%s2 + $0x8] sm:$0xff]
          %v295 = vld [vmem:[%s2 + $0x10] sm:$0xff]
          %v296 = vld [vmem:[%s2 + $0x18] sm:$0xff]
          %v297 = vld [vmem:[%s2 + $0x20] sm:$0xff]
          %v298 = vld [vmem:[%s2 + $0x28] sm:$0xff]
          %v299 = vld [vmem:[%s2 + $0x30] sm:$0xff]
          %v300 = vld [vmem:[%s2 + $0x38] sm:$0xff]
          %v301 = vld [vmem:[%s2 + $0x40] sm:$0xff]
          %v302 = vld [vmem:[%s2 + $0x48] sm:$0xff]
          %v303 = vld [vmem:[%s2 + $0x50] sm:$0xff]
          %v304 = vld [vmem:[%s2 + $0x58] sm:$0xff]
          %v305 = vld [vmem:[%s2 + $0x60] sm:$0xff]
          %v306 = vld [vmem:[%s2 + $0x68] sm:$0xff]
          %v307 = vld [vmem:[%s2 + $0x70] sm:$0xff]
          %v308 = vld [vmem:[%s2 + $0x78] sm:$0xff]
          %v309 = vld [vmem:[%s5] sm:$0xff]
          %v310 = vld [vmem:[%s287] sm:$0xff]
          %v311 = vpack.c.bf16 %v310, %v310
          %v313 = vlaneseq
          %v314 = vshrl.u32 %v313, 7
          %v315 = vsub.s32 0, %v314
          %v316 = vrot.slane %v309, %v315
          %v317 = vlaneseq
          %v318 = vshrl.u32 %v317, 7
          %v319 = vsub.s32 1, %v318
          %v320 = vrot.slane %v309, %v319
          %v321 = vlaneseq
          %v322 = vshrl.u32 %v321, 7
          %v323 = vsub.s32 2, %v322
          %v324 = vrot.slane %v309, %v323
          %v325 = vlaneseq
          %v326 = vshrl.u32 %v325, 7
          %v327 = vsub.s32 3, %v326
          %v328 = vrot.slane %v309, %v327
          %v329 = vlaneseq
          %v330 = vshrl.u32 %v329, 7
          %v331 = vsub.s32 4, %v330
          %v332 = vrot.slane %v309, %v331
          %v333 = vlaneseq
          %v334 = vshrl.u32 %v333, 7
          %v335 = vsub.s32 5, %v334
          %v336 = vrot.slane %v309, %v335
          %v337 = vlaneseq
          %v338 = vshrl.u32 %v337, 7
          %v339 = vsub.s32 6, %v338
          %v340 = vrot.slane %v309, %v339
          %v341 = vlaneseq
          %v342 = vshrl.u32 %v341, 7
          %v343 = vsub.s32 7, %v342
          %v344 = vrot.slane %v309, %v343
          %v369 = vunpack.c.l.b16 %v293
          %v370 = vunpack.c.h.b16 %v293
          %v371 = vunpack.c.l.b16 %v294
          %v372 = vunpack.c.h.b16 %v294
          %v373 = vunpack.c.l.b16 %v295
          %v374 = vunpack.c.h.b16 %v295
          %v375 = vunpack.c.l.b16 %v296
          %v376 = vunpack.c.h.b16 %v296
          %v377 = vunpack.c.l.b16 %v297
          %v378 = vunpack.c.h.b16 %v297
          %v379 = vunpack.c.l.b16 %v298
          %v380 = vunpack.c.h.b16 %v298
          %v381 = vunpack.c.l.b16 %v299
          %v382 = vunpack.c.h.b16 %v299
          %v383 = vunpack.c.l.b16 %v300
          %v384 = vunpack.c.h.b16 %v300
          %v385 = vunpack.c.l.b16 %v301
          %v386 = vunpack.c.h.b16 %v301
          %v387 = vunpack.c.l.b16 %v302
          %v388 = vunpack.c.h.b16 %v302
          %v389 = vunpack.c.l.b16 %v303
          %v390 = vunpack.c.h.b16 %v303
          %v391 = vunpack.c.l.b16 %v304
          %v392 = vunpack.c.h.b16 %v304
          %v393 = vunpack.c.l.b16 %v305
          %v394 = vunpack.c.h.b16 %v305
          %v395 = vunpack.c.l.b16 %v306
          %v396 = vunpack.c.h.b16 %v306
          %v397 = vunpack.c.l.b16 %v307
          %v398 = vunpack.c.h.b16 %v307
          %v399 = vunpack.c.l.b16 %v308
          %v400 = vunpack.c.h.b16 %v308
          %v401 = vpack.c.b16 %v377, %v369
          %v402 = vpack.c.b16 %v378, %v370
          %v403 = vpack.c.b16 %v379, %v371
          %v404 = vpack.c.b16 %v380, %v372
          %v405 = vpack.c.b16 %v381, %v373
          %v406 = vpack.c.b16 %v382, %v374
          %v407 = vpack.c.b16 %v383, %v375
          %v408 = vpack.c.b16 %v384, %v376
          %v409 = vpack.c.b16 %v393, %v385
          %v410 = vpack.c.b16 %v394, %v386
          %v411 = vpack.c.b16 %v395, %v387
          %v412 = vpack.c.b16 %v396, %v388
          %v413 = vpack.c.b16 %v397, %v389
          %v414 = vpack.c.b16 %v398, %v390
          %v415 = vpack.c.b16 %v399, %v391
          %v416 = vpack.c.b16 %v400, %v392
          %vm433 = vcmask 261120
          %v435 = vsel %vm433, %v311, 0
          %437 = vmatprep.subr.bf16.mxu0 %v402
          %438 = vmatpush1.bf16.msra.mxu0 %v401
          %439 = vmatprep.subr.bf16.mxu0 %v410
          %440 = vmatpush1.bf16.msra.mxu0 %v409
          %441 = vmatprep.subr.bf16.mxu0 0
          %442 = vmatpush1.bf16.msra.mxu0 0
          %443 = vmatprep.subr.bf16.mxu0 0
          %444 = vmatpush1.bf16.msra.mxu0 0
          %445 = vmatprep.subr.bf16.mxu0 0
          %446 = vmatpush1.bf16.msra.mxu0 0
          %447 = vmatprep.subr.bf16.mxu0 0
          %448 = vmatpush1.bf16.msra.mxu0 0
          %449 = vmatprep.subr.bf16.mxu0 0
          %450 = vmatpush1.bf16.msra.mxu0 0
          %451 = vmatprep.subr.bf16.mxu0 0
          %452 = vmatpush1.bf16.msra.mxu0 0
          %453 = vmatprep.subr.bf16.mxu0 0
          %454 = vmatpush1.bf16.msra.mxu0 0
          %455 = vmatprep.subr.bf16.mxu0 0
          %456 = vmatpush1.bf16.msra.mxu0 0
          %457 = vmatprep.subr.bf16.mxu0 0
          %458 = vmatpush1.bf16.msra.mxu0 0
          %459 = vmatprep.subr.bf16.mxu0 0
          %460 = vmatpush1.bf16.msra.mxu0 0
          %461 = vmatprep.subr.bf16.mxu0 0
          %462 = vmatpush1.bf16.msra.mxu0 0
          %463 = vmatprep.subr.bf16.mxu0 0
          %464 = vmatpush1.bf16.msra.mxu0 0
          %465 = vmatprep.subr.bf16.mxu0 0
          %466 = vmatpush1.bf16.msra.mxu0 0
          %467 = vmatprep.subr.bf16.mxu0 0
          %468 = vmatpush1.bf16.msra.mxu0 0
          %469 = vmatprep.mubr.bf16.mxu0 0
          %470 = vmatmul.mubr.bf16.gmra.mrb[0].mxu0 %v435
          %v471 = vpop.f32.mrb[0].mxu0
          %v472 = vadd.f32 %v316, %v471
          %v473 = vpop.f32.mrb[0].mxu0
          %v474 = vadd.f32 %v320, %v473
          %v475 = vpop.f32.mrb[0].mxu0
          %v476 = vpop.f32.mrb[0].mxu0
          %477 = vdwg.mxu0
          %478 = vmatprep.subr.bf16.mxu0 %v404
          %479 = vmatpush1.bf16.msra.mxu0 %v403
          %480 = vmatprep.subr.bf16.mxu0 %v412
          %481 = vmatpush1.bf16.msra.mxu0 %v411
          %482 = vmatprep.subr.bf16.mxu0 0
          %483 = vmatpush1.bf16.msra.mxu0 0
          %484 = vmatprep.subr.bf16.mxu0 0
          %485 = vmatpush1.bf16.msra.mxu0 0
          %486 = vmatprep.subr.bf16.mxu0 0
          %487 = vmatpush1.bf16.msra.mxu0 0
          %488 = vmatprep.subr.bf16.mxu0 0
          %489 = vmatpush1.bf16.msra.mxu0 0
          %490 = vmatprep.subr.bf16.mxu0 0
          %491 = vmatpush1.bf16.msra.mxu0 0
          %492 = vmatprep.subr.bf16.mxu0 0
          %493 = vmatpush1.bf16.msra.mxu0 0
          %494 = vmatprep.subr.bf16.mxu0 0
          %495 = vmatpush1.bf16.msra.mxu0 0
          %496 = vmatprep.subr.bf16.mxu0 0
          %497 = vmatpush1.bf16.msra.mxu0 0
          %498 = vmatprep.subr.bf16.mxu0 0
          %499 = vmatpush1.bf16.msra.mxu0 0
          %500 = vmatprep.subr.bf16.mxu0 0
          %501 = vmatpush1.bf16.msra.mxu0 0
          %502 = vmatprep.subr.bf16.mxu0 0
          %503 = vmatpush1.bf16.msra.mxu0 0
          %504 = vmatprep.subr.bf16.mxu0 0
          %505 = vmatpush1.bf16.msra.mxu0 0
          %506 = vmatprep.subr.bf16.mxu0 0
          %507 = vmatpush1.bf16.msra.mxu0 0
          %508 = vmatprep.subr.bf16.mxu0 0
          %509 = vmatpush1.bf16.msra.mxu0 0
          %510 = vmatprep.mubr.bf16.mxu0 0
          %511 = vmatmul.mubr.bf16.gmra.mrb[0].mxu0 %v435
          %v512 = vpop.f32.mrb[0].mxu0
          %v513 = vadd.f32 %v324, %v512
          %v514 = vpop.f32.mrb[0].mxu0
          %v515 = vadd.f32 %v328, %v514
          %v516 = vpop.f32.mrb[0].mxu0
          %v517 = vpop.f32.mrb[0].mxu0
          %518 = vdwg.mxu0
          %519 = vmatprep.subr.bf16.mxu0 %v406
          %520 = vmatpush1.bf16.msra.mxu0 %v405
          %521 = vmatprep.subr.bf16.mxu0 %v414
          %522 = vmatpush1.bf16.msra.mxu0 %v413
          %523 = vmatprep.subr.bf16.mxu0 0
          %524 = vmatpush1.bf16.msra.mxu0 0
          %525 = vmatprep.subr.bf16.mxu0 0
          %526 = vmatpush1.bf16.msra.mxu0 0
          %527 = vmatprep.subr.bf16.mxu0 0
          %528 = vmatpush1.bf16.msra.mxu0 0
          %529 = vmatprep.subr.bf16.mxu0 0
          %530 = vmatpush1.bf16.msra.mxu0 0
          %531 = vmatprep.subr.bf16.mxu0 0
          %532 = vmatpush1.bf16.msra.mxu0 0
          %533 = vmatprep.subr.bf16.mxu0 0
          %534 = vmatpush1.bf16.msra.mxu0 0
          %535 = vmatprep.subr.bf16.mxu0 0
          %536 = vmatpush1.bf16.msra.mxu0 0
          %537 = vmatprep.subr.bf16.mxu0 0
          %538 = vmatpush1.bf16.msra.mxu0 0
          %539 = vmatprep.subr.bf16.mxu0 0
          %540 = vmatpush1.bf16.msra.mxu0 0
          %541 = vmatprep.subr.bf16.mxu0 0
          %542 = vmatpush1.bf16.msra.mxu0 0
          %543 = vmatprep.subr.bf16.mxu0 0
          %544 = vmatpush1.bf16.msra.mxu0 0
          %545 = vmatprep.subr.bf16.mxu0 0
          %546 = vmatpush1.bf16.msra.mxu0 0
          %547 = vmatprep.subr.bf16.mxu0 0
          %548 = vmatpush1.bf16.msra.mxu0 0
          %549 = vmatprep.subr.bf16.mxu0 0
          %550 = vmatpush1.bf16.msra.mxu0 0
          %551 = vmatprep.mubr.bf16.mxu0 0
          %552 = vmatmul.mubr.bf16.gmra.mrb[0].mxu0 %v435
          %v553 = vpop.f32.mrb[0].mxu0
          %v554 = vadd.f32 %v332, %v553
          %v555 = vpop.f32.mrb[0].mxu0
          %v556 = vadd.f32 %v336, %v555
          %v557 = vpop.f32.mrb[0].mxu0
          %v558 = vpop.f32.mrb[0].mxu0
          %559 = vdwg.mxu0
          %560 = vmatprep.subr.bf16.mxu0 %v408
          %561 = vmatpush1.bf16.msra.mxu0 %v407
          %562 = vmatprep.subr.bf16.mxu0 %v416
          %563 = vmatpush1.bf16.msra.mxu0 %v415
          %564 = vmatprep.subr.bf16.mxu0 0
          %565 = vmatpush1.bf16.msra.mxu0 0
          %566 = vmatprep.subr.bf16.mxu0 0
          %567 = vmatpush1.bf16.msra.mxu0 0
          %568 = vmatprep.subr.bf16.mxu0 0
          %569 = vmatpush1.bf16.msra.mxu0 0
          %570 = vmatprep.subr.bf16.mxu0 0
          %571 = vmatpush1.bf16.msra.mxu0 0
          %572 = vmatprep.subr.bf16.mxu0 0
          %573 = vmatpush1.bf16.msra.mxu0 0
          %574 = vmatprep.subr.bf16.mxu0 0
          %575 = vmatpush1.bf16.msra.mxu0 0
          %576 = vmatprep.subr.bf16.mxu0 0
          %577 = vmatpush1.bf16.msra.mxu0 0
          %578 = vmatprep.subr.bf16.mxu0 0
          %579 = vmatpush1.bf16.msra.mxu0 0
          %580 = vmatprep.subr.bf16.mxu0 0
          %581 = vmatpush1.bf16.msra.mxu0 0
          %582 = vmatprep.subr.bf16.mxu0 0
          %583 = vmatpush1.bf16.msra.mxu0 0
          %584 = vmatprep.subr.bf16.mxu0 0
          %585 = vmatpush1.bf16.msra.mxu0 0
          %586 = vmatprep.subr.bf16.mxu0 0
          %587 = vmatpush1.bf16.msra.mxu0 0
          %588 = vmatprep.subr.bf16.mxu0 0
          %589 = vmatpush1.bf16.msra.mxu0 0
          %590 = vmatprep.subr.bf16.mxu0 0
          %591 = vmatpush1.bf16.msra.mxu0 0
          %592 = vmatprep.mubr.bf16.mxu0 0
          %593 = vmatmul.mubr.bf16.gmra.mrb[0].mxu0 %v435
          %v594 = vpop.f32.mrb[0].mxu0
          %v595 = vadd.f32 %v340, %v594
          %v596 = vpop.f32.mrb[0].mxu0
          %v597 = vadd.f32 %v344, %v596
          %v598 = vpop.f32.mrb[0].mxu0
          %v599 = vpop.f32.mrb[0].mxu0
          %600 = vdwg.mxu0
          %v601 = vpack.c.bf16 %v472, %v472
          %v602 = vpack.c.bf16 %v474, %v474
          %v603 = vpack.c.bf16 %v513, %v513
          %v604 = vpack.c.bf16 %v515, %v515
          %v605 = vpack.c.bf16 %v554, %v554
          %v606 = vpack.c.bf16 %v556, %v556
          %v607 = vpack.c.bf16 %v595, %v595
          %v608 = vpack.c.bf16 %v597, %v597
          %v617 = vunpack.c.l.b16 %v601
          %v618 = vunpack.c.l.b16 %v602
          %v619 = vunpack.c.l.b16 %v603
          %v620 = vunpack.c.l.b16 %v604
          %v621 = vunpack.c.l.b16 %v605
          %v622 = vunpack.c.l.b16 %v606
          %v623 = vunpack.c.l.b16 %v607
          %v624 = vunpack.c.l.b16 %v608
          %v625 = vpack.c.b16 %v618, %v617
          %v626 = vpack.c.b16 %v620, %v619
          %v627 = vpack.c.b16 %v622, %v621
          %v628 = vpack.c.b16 %v624, %v623
          %s633 = smul.u32 0, 8
          %s634 = smul.addr %s633, 4
          %s635 = scalar_lea.vmem [#allocation2], %s634
          %636 = vst [vmem:[%s635] sm:$0xff] %v625
          %637 = vst [vmem:[%s635 + $0x8] sm:$0xff] %v626
          %638 = vst [vmem:[%s635 + $0x10] sm:$0xff] %v627
          %639 = vst [vmem:[%s635 + $0x18] sm:$0xff] %v628
        $region52: #{tpu_custom_call.1} parent=47 // pred_fallthru
          _
        %s640 = smul.u32 %s26, 8
        %s641 = scalar_lea.vmem %s287, %s640
        %v642 = vld [vmem:[%s641] sm:$0xff]
        %v643 = vpack.c.bf16 %v642, %v642
        %v644 = vld [vmem:[%s1] sm:$0xff]
        %v645 = vld [vmem:[%s1 + $0x8] sm:$0xff]
        %v646 = vld [vmem:[%s1 + $0x10] sm:$0xff]
        %v647 = vld [vmem:[%s1 + $0x18] sm:$0xff]
        %v648 = vld [vmem:[%s1 + $0x20] sm:$0xff]
        %v649 = vld [vmem:[%s1 + $0x28] sm:$0xff]
        %v650 = vld [vmem:[%s1 + $0x30] sm:$0xff]
        %v651 = vld [vmem:[%s1 + $0x38] sm:$0xff]
        %v652 = vld [vmem:[%s4] sm:$0xf]
        %v654 = vlaneseq
        %v655 = vshrl.u32 %v654, 7
        %v656 = vsub.s32 0, %v655
        %v657 = vrot.slane %v652, %v656
        %v658 = vlaneseq
        %v659 = vshrl.u32 %v658, 7
        %v660 = vsub.s32 1, %v659
        %v661 = vrot.slane %v652, %v660
        %v662 = vlaneseq
        %v663 = vshrl.u32 %v662, 7
        %v664 = vsub.s32 2, %v663
        %v665 = vrot.slane %v652, %v664
        %v666 = vlaneseq
        %v667 = vshrl.u32 %v666, 7
        %v668 = vsub.s32 3, %v667
        %v669 = vrot.slane %v652, %v668
        %v682 = vunpack.c.l.b16 %v644
        %v683 = vunpack.c.h.b16 %v644
        %v684 = vunpack.c.l.b16 %v645
        %v685 = vunpack.c.h.b16 %v645
        %v686 = vunpack.c.l.b16 %v646
        %v687 = vunpack.c.h.b16 %v646
        %v688 = vunpack.c.l.b16 %v647
        %v689 = vunpack.c.h.b16 %v647
        %v690 = vunpack.c.l.b16 %v648
        %v691 = vunpack.c.h.b16 %v648
        %v692 = vunpack.c.l.b16 %v649
        %v693 = vunpack.c.h.b16 %v649
        %v694 = vunpack.c.l.b16 %v650
        %v695 = vunpack.c.h.b16 %v650
        %v696 = vunpack.c.l.b16 %v651
        %v697 = vunpack.c.h.b16 %v651
        %v698 = vpack.c.b16 %v686, %v682
        %v699 = vpack.c.b16 %v687, %v683
        %v700 = vpack.c.b16 %v688, %v684
        %v701 = vpack.c.b16 %v689, %v685
        %v702 = vpack.c.b16 %v694, %v690
        %v703 = vpack.c.b16 %v695, %v691
        %v704 = vpack.c.b16 %v696, %v692
        %v705 = vpack.c.b16 %v697, %v693
        %vm714 = vcmask 261120
        %v716 = vsel %vm714, %v643, 0
        %718 = vmatprep.subr.bf16.mxu0 %v699
        %719 = vmatpush1.bf16.msra.mxu0 %v698
        %720 = vmatprep.subr.bf16.mxu0 %v703
        %721 = vmatpush1.bf16.msra.mxu0 %v702
        %722 = vmatprep.subr.bf16.mxu0 0
        %723 = vmatpush1.bf16.msra.mxu0 0
        %724 = vmatprep.subr.bf16.mxu0 0
        %725 = vmatpush1.bf16.msra.mxu0 0
        %726 = vmatprep.subr.bf16.mxu0 0
        %727 = vmatpush1.bf16.msra.mxu0 0
        %728 = vmatprep.subr.bf16.mxu0 0
        %729 = vmatpush1.bf16.msra.mxu0 0
        %730 = vmatprep.subr.bf16.mxu0 0
        %731 = vmatpush1.bf16.msra.mxu0 0
        %732 = vmatprep.subr.bf16.mxu0 0
        %733 = vmatpush1.bf16.msra.mxu0 0
        %734 = vmatprep.subr.bf16.mxu0 0
        %735 = vmatpush1.bf16.msra.mxu0 0
        %736 = vmatprep.subr.bf16.mxu0 0
        %737 = vmatpush1.bf16.msra.mxu0 0
        %738 = vmatprep.subr.bf16.mxu0 0
        %739 = vmatpush1.bf16.msra.mxu0 0
        %740 = vmatprep.subr.bf16.mxu0 0
        %741 = vmatpush1.bf16.msra.mxu0 0
        %742 = vmatprep.subr.bf16.mxu0 0
        %743 = vmatpush1.bf16.msra.mxu0 0
        %744 = vmatprep.subr.bf16.mxu0 0
        %745 = vmatpush1.bf16.msra.mxu0 0
        %746 = vmatprep.subr.bf16.mxu0 0
        %747 = vmatpush1.bf16.msra.mxu0 0
        %748 = vmatprep.subr.bf16.mxu0 0
        %749 = vmatpush1.bf16.msra.mxu0 0
        %750 = vmatprep.mubr.bf16.mxu0 0
        %751 = vmatmul.mubr.bf16.gmra.mrb[0].mxu0 %v716
        %v752 = vpop.f32.mrb[0].mxu0
        %v753 = vadd.f32 %v657, %v752
        %v754 = vpop.f32.mrb[0].mxu0
        %v755 = vadd.f32 %v661, %v754
        %v756 = vpop.f32.mrb[0].mxu0
        %v757 = vpop.f32.mrb[0].mxu0
        %758 = vdwg.mxu0
        %759 = vmatprep.subr.bf16.mxu0 %v701
        %760 = vmatpush1.bf16.msra.mxu0 %v700
        %761 = vmatprep.subr.bf16.mxu0 %v705
        %762 = vmatpush1.bf16.msra.mxu0 %v704
        %763 = vmatprep.subr.bf16.mxu0 0
        %764 = vmatpush1.bf16.msra.mxu0 0
        %765 = vmatprep.subr.bf16.mxu0 0
        %766 = vmatpush1.bf16.msra.mxu0 0
        %767 = vmatprep.subr.bf16.mxu0 0
        %768 = vmatpush1.bf16.msra.mxu0 0
        %769 = vmatprep.subr.bf16.mxu0 0
        %770 = vmatpush1.bf16.msra.mxu0 0
        %771 = vmatprep.subr.bf16.mxu0 0
        %772 = vmatpush1.bf16.msra.mxu0 0
        %773 = vmatprep.subr.bf16.mxu0 0
        %774 = vmatpush1.bf16.msra.mxu0 0
        %775 = vmatprep.subr.bf16.mxu0 0
        %776 = vmatpush1.bf16.msra.mxu0 0
        %777 = vmatprep.subr.bf16.mxu0 0
        %778 = vmatpush1.bf16.msra.mxu0 0
        %779 = vmatprep.subr.bf16.mxu0 0
        %780 = vmatpush1.bf16.msra.mxu0 0
        %781 = vmatprep.subr.bf16.mxu0 0
        %782 = vmatpush1.bf16.msra.mxu0 0
        %783 = vmatprep.subr.bf16.mxu0 0
        %784 = vmatpush1.bf16.msra.mxu0 0
        %785 = vmatprep.subr.bf16.mxu0 0
        %786 = vmatpush1.bf16.msra.mxu0 0
        %787 = vmatprep.subr.bf16.mxu0 0
        %788 = vmatpush1.bf16.msra.mxu0 0
        %789 = vmatprep.subr.bf16.mxu0 0
        %790 = vmatpush1.bf16.msra.mxu0 0
        %791 = vmatprep.mubr.bf16.mxu0 0
        %792 = vmatmul.mubr.bf16.gmra.mrb[0].mxu0 %v716
        %v793 = vpop.f32.mrb[0].mxu0
        %v794 = vadd.f32 %v665, %v793
        %v795 = vpop.f32.mrb[0].mxu0
        %v796 = vadd.f32 %v669, %v795
        %v797 = vpop.f32.mrb[0].mxu0
        %v798 = vpop.f32.mrb[0].mxu0
        %799 = vdwg.mxu0
        %v800 = vpack.c.bf16 %v753, %v753
        %v801 = vpack.c.bf16 %v755, %v755
        %v802 = vpack.c.bf16 %v794, %v794
        %v803 = vpack.c.bf16 %v796, %v796
        %v804 = vlaneseq
        %v805 = vshrl.u32 %v804, 7
        %v806 = vlaneseq
        %v807 = vand.u32 %v806, 127
        %vm808 = vcmp.ge.s32.totalorder %v805, %v807
        // While loop
        $region53: #{tpu_custom_call.1} parent=47 // loop_pre_header
          _
        $region54: #{tpu_custom_call.1} parent=47 // loop_header
          %s810 = sphi 0, %s812
          %p811 = scmp.ge.s32.totalorder %s810, %s26
          %v815 = vphi -inf, %v870
          %v816 = vphi 0.0, %v881
          %v817 = vphi 0.0, %v931
        $region55: #{tpu_custom_call.1} parent=47 // loop_header_branch
          %814 = sbr.rel (%p811) target = $region59
        $region56: #{tpu_custom_call.1} parent=47 // loop_body
          %s818 = smul.u32 %s810, 8
          %s819 = sshra.s32 %s818, 3
          %s820 = sand.u32 %s818, 7
          %s821 = smul.u32 %s819, 8
          %s822 = smul.addr %s821, 4
          %s823 = scalar_lea.vmem [#allocation2], %s822
          %v824 = vld [vmem:[%s823] sm:$0xf]
          %v825 = vld [vmem:[%s823 + $0x10] sm:$0xf]
          %826 = vmatprep.subr.bf16.mxu0 0
          %827 = vmatpush1.bf16.xpose.msra.mxu0 %v824
          %828 = vmatprep.subr.bf16.mxu0 0
          %829 = vmatpush1.bf16.xpose.msra.mxu0 0
          %830 = vmatprep.subr.bf16.mxu0 0
          %831 = vmatpush1.bf16.xpose.msra.mxu0 0
          %832 = vmatprep.subr.bf16.mxu0 0
          %833 = vmatpush1.bf16.xpose.msra.mxu0 0
          %834 = vmatprep.subr.bf16.mxu0 0
          %835 = vmatpush1.bf16.xpose.msra.mxu0 0
          %836 = vmatprep.subr.bf16.mxu0 0
          %837 = vmatpush1.bf16.xpose.msra.mxu0 0
          %838 = vmatprep.subr.bf16.mxu0 0
          %839 = vmatpush1.bf16.xpose.msra.mxu0 0
          %840 = vmatprep.subr.bf16.mxu0 0
          %841 = vmatpush1.bf16.xpose.msra.mxu0 0
          %842 = vmatprep.subr.bf16.mxu0 0
          %843 = vmatpush1.bf16.xpose.msra.mxu0 0
          %844 = vmatprep.subr.bf16.mxu0 0
          %845 = vmatpush1.bf16.xpose.msra.mxu0 0
          %846 = vmatprep.subr.bf16.mxu0 0
          %847 = vmatpush1.bf16.xpose.msra.mxu0 0
          %848 = vmatprep.subr.bf16.mxu0 0
          %849 = vmatpush1.bf16.xpose.msra.mxu0 0
          %850 = vmatprep.subr.bf16.mxu0 0
          %851 = vmatpush1.bf16.xpose.msra.mxu0 0
          %852 = vmatprep.subr.bf16.mxu0 0
          %853 = vmatpush1.bf16.xpose.msra.mxu0 0
          %854 = vmatprep.subr.bf16.mxu0 0
          %855 = vmatpush1.bf16.xpose.msra.mxu0 0
          %856 = vmatprep.subr.bf16.mxu0 0
          %857 = vmatpush1.bf16.xpose.msra.mxu0 0
          %858 = vmatprep.mubr.bf16.mxu0 0
          %859 = vmatmul.mubr.bf16.gmra.mrb[0].mxu0 %v800
          %v860 = vpop.f32.mrb[0].mxu0
          %v861 = vadd.f32 0.0, %v860
          %v862 = vpop.f32.mrb[0].mxu0
          %v863 = vpop.f32.mrb[0].mxu0
          %v864 = vpop.f32.mrb[0].mxu0
          %865 = vdwg.mxu0
          %vm866 = vcmask 64512
          %v867 = vsel %vm866, %v861, -inf
          %868 = vmax.xlane.f32.xlu0 %v867
          %v869 = vpop.xlane.xlu0 %868
          %v870 = vmax.f32 %v815, %v869
          %v871 = vsub.f32 %v815, %v870
          %v872 = vmul.f32 %v871, 1.442695
          %v873 = vpow.pop %v872
          %v874 = vsub.f32 %v861, %v870
          %v875 = vmul.f32 %v874, 1.442695
          %v876 = vpow.pop %v875
          %v877 = vmul.f32 %v873, %v816
          %v878 = vsel %vm866, %v876, 0.0
          %879 = vadd.xlane.f32.xlu0 %v878
          %v880 = vpop.xlane.xlu0 %879
          %v881 = vadd.f32 %v877, %v880
          %v882 = vmul.f32 %v873, %v817
          %v883 = vpack.c.bf16 %v876, %v876
          %v885 = vsel %vm866, %v883, 0
          %vm887 = vcmask 1043456
          %v889 = vsel %vm887, %v825, 0
          %891 = vmatprep.subr.bf16.mxu0 0
          %892 = vmatpush1.bf16.msra.mxu0 %v889
          %893 = vmatprep.subr.bf16.mxu0 0
          %894 = vmatpush1.bf16.msra.mxu0 0
          %895 = vmatprep.subr.bf16.mxu0 0
          %896 = vmatpush1.bf16.msra.mxu0 0
          %897 = vmatprep.subr.bf16.mxu0 0
          %898 = vmatpush1.bf16.msra.mxu0 0
          %899 = vmatprep.subr.bf16.mxu0 0
          %900 = vmatpush1.bf16.msra.mxu0 0
          %901 = vmatprep.subr.bf16.mxu0 0
          %902 = vmatpush1.bf16.msra.mxu0 0
          %903 = vmatprep.subr.bf16.mxu0 0
          %904 = vmatpush1.bf16.msra.mxu0 0
          %905 = vmatprep.subr.bf16.mxu0 0
          %906 = vmatpush1.bf16.msra.mxu0 0
          %907 = vmatprep.subr.bf16.mxu0 0
          %908 = vmatpush1.bf16.msra.mxu0 0
          %909 = vmatprep.subr.bf16.mxu0 0
          %910 = vmatpush1.bf16.msra.mxu0 0
          %911 = vmatprep.subr.bf16.mxu0 0
          %912 = vmatpush1.bf16.msra.mxu0 0
          %913 = vmatprep.subr.bf16.mxu0 0
          %914 = vmatpush1.bf16.msra.mxu0 0
          %915 = vmatprep.subr.bf16.mxu0 0
          %916 = vmatpush1.bf16.msra.mxu0 0
          %917 = vmatprep.subr.bf16.mxu0 0
          %918 = vmatpush1.bf16.msra.mxu0 0
          %919 = vmatprep.subr.bf16.mxu0 0
          %920 = vmatpush1.bf16.msra.mxu0 0
          %921 = vmatprep.subr.bf16.mxu0 0
          %922 = vmatpush1.bf16.msra.mxu0 0
          %923 = vmatprep.mubr.bf16.mxu0 0
          %924 = vmatmul.mubr.bf16.gmra.mrb[0].mxu0 %v885
          %v925 = vpop.f32.mrb[0].mxu0
          %v926 = vadd.f32 0.0, %v925
          %v927 = vpop.f32.mrb[0].mxu0
          %v928 = vpop.f32.mrb[0].mxu0
          %v929 = vpop.f32.mrb[0].mxu0
          %930 = vdwg.mxu0
          %v931 = vadd.f32 %v882, %v926
        $region57: #{tpu_custom_call.1} parent=47 // loop_footer
          %s812 = sadd.s32 %s810, 1
        $region58: #{tpu_custom_call.1} parent=47 // loop_footer_branch
          %809 = sbr.rel target = $region54
        $region59: #{tpu_custom_call.1} parent=47 // loop_exit
          _
        %s932 = sshra.s32 %s640, 3
        %s933 = sand.u32 %s640, 7
        %s934 = smul.u32 %s932, 8
        %s935 = smul.addr %s934, 4
        %s936 = scalar_lea.vmem [#allocation2], %s935
        %v937 = vld [vmem:[%s936] sm:$0xf]
        %v938 = vld [vmem:[%s936 + $0x10] sm:$0xf]
        %939 = vmatprep.subr.bf16.mxu0 0
        %940 = vmatpush1.bf16.xpose.msra.mxu0 %v937
        %941 = vmatprep.subr.bf16.mxu0 0
        %942 = vmatpush1.bf16.xpose.msra.mxu0 0
        %943 = vmatprep.subr.bf16.mxu0 0
        %944 = vmatpush1.bf16.xpose.msra.mxu0 0
        %945 = vmatprep.subr.bf16.mxu0 0
        %946 = vmatpush1.bf16.xpose.msra.mxu0 0
        %947 = vmatprep.subr.bf16.mxu0 0
        %948 = vmatpush1.bf16.xpose.msra.mxu0 0
        %949 = vmatprep.subr.bf16.mxu0 0
        %950 = vmatpush1.bf16.xpose.msra.mxu0 0
        %951 = vmatprep.subr.bf16.mxu0 0
        %952 = vmatpush1.bf16.xpose.msra.mxu0 0
        %953 = vmatprep.subr.bf16.mxu0 0
        %954 = vmatpush1.bf16.xpose.msra.mxu0 0
        %955 = vmatprep.subr.bf16.mxu0 0
        %956 = vmatpush1.bf16.xpose.msra.mxu0 0
        %957 = vmatprep.subr.bf16.mxu0 0
        %958 = vmatpush1.bf16.xpose.msra.mxu0 0
        %959 = vmatprep.subr.bf16.mxu0 0
        %960 = vmatpush1.bf16.xpose.msra.mxu0 0
        %961 = vmatprep.subr.bf16.mxu0 0
        %962 = vmatpush1.bf16.xpose.msra.mxu0 0
        %963 = vmatprep.subr.bf16.mxu0 0
        %964 = vmatpush1.bf16.xpose.msra.mxu0 0
        %965 = vmatprep.subr.bf16.mxu0 0
        %966 = vmatpush1.bf16.xpose.msra.mxu0 0
        %967 = vmatprep.subr.bf16.mxu0 0
        %968 = vmatpush1.bf16.xpose.msra.mxu0 0
        %969 = vmatprep.subr.bf16.mxu0 0
        %970 = vmatpush1.bf16.xpose.msra.mxu0 0
        %971 = vmatprep.mubr.bf16.mxu0 0
        %972 = vmatmul.mubr.bf16.gmra.mrb[0].mxu0 %v800
        %v973 = vpop.f32.mrb[0].mxu0
        %v974 = vadd.f32 0.0, %v973
        %v975 = vpop.f32.mrb[0].mxu0
        %v976 = vpop.f32.mrb[0].mxu0
        %v977 = vpop.f32.mrb[0].mxu0
        %978 = vdwg.mxu0
        %v979 = vsel %vm808, %v974, -100000.0
        %vm980 = vcmask 64512
        %v981 = vsel %vm980, %v979, -inf
        %982 = vmax.xlane.f32.xlu0 %v981
        %v983 = vpop.xlane.xlu0 %982
        %v984 = vmax.f32 %v815, %v983
        %v985 = vsub.f32 %v815, %v984
        %v986 = vmul.f32 %v985, 1.442695
        %v987 = vpow.pop %v986
        %v988 = vsub.f32 %v979, %v984
        %v989 = vmul.f32 %v988, 1.442695
        %v990 = vpow.pop %v989
        %v991 = vmul.f32 %v987, %v816
        %v992 = vsel %vm980, %v990, 0.0
        %993 = vadd.xlane.f32.xlu0 %v992
        %v994 = vpop.xlane.xlu0 %993
        %v995 = vadd.f32 %v991, %v994
        %v996 = vmul.f32 %v987, %v817
        %v997 = vpack.c.bf16 %v990, %v990
        %v999 = vsel %vm980, %v997, 0
        %vm1001 = vcmask 1043456
        %v1003 = vsel %vm1001, %v938, 0
        %1005 = vmatprep.subr.bf16.mxu0 0
        %1006 = vmatpush1.bf16.msra.mxu0 %v1003
        %1007 = vmatprep.subr.bf16.mxu0 0
        %1008 = vmatpush1.bf16.msra.mxu0 0
        %1009 = vmatprep.subr.bf16.mxu0 0
        %1010 = vmatpush1.bf16.msra.mxu0 0
        %1011 = vmatprep.subr.bf16.mxu0 0
        %1012 = vmatpush1.bf16.msra.mxu0 0
        %1013 = vmatprep.subr.bf16.mxu0 0
        %1014 = vmatpush1.bf16.msra.mxu0 0
        %1015 = vmatprep.subr.bf16.mxu0 0
        %1016 = vmatpush1.bf16.msra.mxu0 0
        %1017 = vmatprep.subr.bf16.mxu0 0
        %1018 = vmatpush1.bf16.msra.mxu0 0
        %1019 = vmatprep.subr.bf16.mxu0 0
        %1020 = vmatpush1.bf16.msra.mxu0 0
        %1021 = vmatprep.subr.bf16.mxu0 0
        %1022 = vmatpush1.bf16.msra.mxu0 0
        %1023 = vmatprep.subr.bf16.mxu0 0
        %1024 = vmatpush1.bf16.msra.mxu0 0
        %1025 = vmatprep.subr.bf16.mxu0 0
        %1026 = vmatpush1.bf16.msra.mxu0 0
        %1027 = vmatprep.subr.bf16.mxu0 0
        %1028 = vmatpush1.bf16.msra.mxu0 0
        %1029 = vmatprep.subr.bf16.mxu0 0
        %1030 = vmatpush1.bf16.msra.mxu0 0
        %1031 = vmatprep.subr.bf16.mxu0 0
        %1032 = vmatpush1.bf16.msra.mxu0 0
        %1033 = vmatprep.subr.bf16.mxu0 0
        %1034 = vmatpush1.bf16.msra.mxu0 0
        %1035 = vmatprep.subr.bf16.mxu0 0
        %1036 = vmatpush1.bf16.msra.mxu0 0
        %1037 = vmatprep.mubr.bf16.mxu0 0
        %1038 = vmatmul.mubr.bf16.gmra.mrb[0].mxu0 %v999
        %v1039 = vpop.f32.mrb[0].mxu0
        %v1040 = vadd.f32 0.0, %v1039
        %v1041 = vpop.f32.mrb[0].mxu0
        %v1042 = vpop.f32.mrb[0].mxu0
        %v1043 = vpop.f32.mrb[0].mxu0
        %1044 = vdwg.mxu0
        %v1045 = vadd.f32 %v996, %v1040
        %v1046 = vrcp.pop %v995
        %v1047 = vmul.f32 %v1045, %v1046
        %v1048 = vpack.c.bf16 %v1047, %v1047
        %1049 = vst [vmem:[#allocation3] sm:$0xf] %v1048
        // While loop
        $region60: #{tpu_custom_call.1} parent=47 // loop_pre_header
          _
        $region61: #{tpu_custom_call.1} parent=47 // loop_header
          %s1051 = sphi 0, %s1053
          %p1052 = scmp.ge.s32.totalorder %s1051, %s26
          %v1056 = vphi -inf, %v1110
          %v1057 = vphi 0.0, %v1121
          %v1058 = vphi 0.0, %v1170
        $region62: #{tpu_custom_call.1} parent=47 // loop_header_branch
          %1055 = sbr.rel (%p1052) target = $region66
        $region63: #{tpu_custom_call.1} parent=47 // loop_body
          %s1059 = smul.u32 %s1051, 8
          %s1060 = sshra.s32 %s1059, 3
          %s1061 = sand.u32 %s1059, 7
          %s1062 = smul.u32 %s1060, 8
          %s1063 = smul.addr %s1062, 4
          %s1064 = scalar_lea.vmem [#allocation2], %s1063
          %v1065 = vld [vmem:[%s1064 + $0x4] sm:$0xf]
          %v1066 = vld [vmem:[%s1064 + $0x14] sm:$0xf]
          %1067 = vmatprep.subr.bf16.mxu0 0
          %1068 = vmatpush1.bf16.xpose.msra.mxu0 %v1065
          %1069 = vmatprep.subr.bf16.mxu0 0
          %1070 = vmatpush1.bf16.xpose.msra.mxu0 0
          %1071 = vmatprep.subr.bf16.mxu0 0
          %1072 = vmatpush1.bf16.xpose.msra.mxu0 0
          %1073 = vmatprep.subr.bf16.mxu0 0
          %1074 = vmatpush1.bf16.xpose.msra.mxu0 0
          %1075 = vmatprep.subr.bf16.mxu0 0
          %1076 = vmatpush1.bf16.xpose.msra.mxu0 0
          %1077 = vmatprep.subr.bf16.mxu0 0
          %1078 = vmatpush1.bf16.xpose.msra.mxu0 0
          %1079 = vmatprep.subr.bf16.mxu0 0
          %1080 = vmatpush1.bf16.xpose.msra.mxu0 0
          %1081 = vmatprep.subr.bf16.mxu0 0
          %1082 = vmatpush1.bf16.xpose.msra.mxu0 0
          %1083 = vmatprep.subr.bf16.mxu0 0
          %1084 = vmatpush1.bf16.xpose.msra.mxu0 0
          %1085 = vmatprep.subr.bf16.mxu0 0
          %1086 = vmatpush1.bf16.xpose.msra.mxu0 0
          %1087 = vmatprep.subr.bf16.mxu0 0
          %1088 = vmatpush1.bf16.xpose.msra.mxu0 0
          %1089 = vmatprep.subr.bf16.mxu0 0
          %1090 = vmatpush1.bf16.xpose.msra.mxu0 0
          %1091 = vmatprep.subr.bf16.mxu0 0
          %1092 = vmatpush1.bf16.xpose.msra.mxu0 0
          %1093 = vmatprep.subr.bf16.mxu0 0
          %1094 = vmatpush1.bf16.xpose.msra.mxu0 0
          %1095 = vmatprep.subr.bf16.mxu0 0
          %1096 = vmatpush1.bf16.xpose.msra.mxu0 0
          %1097 = vmatprep.subr.bf16.mxu0 0
          %1098 = vmatpush1.bf16.xpose.msra.mxu0 0
          %1099 = vmatprep.mubr.bf16.mxu0 0
          %1100 = vmatmul.mubr.bf16.gmra.mrb[0].mxu0 %v801
          %v1101 = vpop.f32.mrb[0].mxu0
          %v1102 = vadd.f32 0.0, %v1101
          %v1103 = vpop.f32.mrb[0].mxu0
          %v1104 = vpop.f32.mrb[0].mxu0
          %v1105 = vpop.f32.mrb[0].mxu0
          %1106 = vdwg.mxu0
          %v1107 = vsel %vm980, %v1102, -inf
          %1108 = vmax.xlane.f32.xlu0 %v1107
          %v1109 = vpop.xlane.xlu0 %1108
          %v1110 = vmax.f32 %v1056, %v1109
          %v1111 = vsub.f32 %v1056, %v1110
          %v1112 = vmul.f32 %v1111, 1.442695
          %v1113 = vpow.pop %v1112
          %v1114 = vsub.f32 %v1102, %v1110
          %v1115 = vmul.f32 %v1114, 1.442695
          %v1116 = vpow.pop %v1115
          %v1117 = vmul.f32 %v1113, %v1057
          %v1118 = vsel %vm980, %v1116, 0.0
          %1119 = vadd.xlane.f32.xlu0 %v1118
          %v1120 = vpop.xlane.xlu0 %1119
          %v1121 = vadd.f32 %v1117, %v1120
          %v1122 = vmul.f32 %v1113, %v1058
          %v1123 = vpack.c.bf16 %v1116, %v1116
          %v1125 = vsel %vm980, %v1123, 0
          %v1128 = vsel %vm1001, %v1066, 0
          %1130 = vmatprep.subr.bf16.mxu0 0
          %1131 = vmatpush1.bf16.msra.mxu0 %v1128
          %1132 = vmatprep.subr.bf16.mxu0 0
          %1133 = vmatpush1.bf16.msra.mxu0 0
          %1134 = vmatprep.subr.bf16.mxu0 0
          %1135 = vmatpush1.bf16.msra.mxu0 0
          %1136 = vmatprep.subr.bf16.mxu0 0
          %1137 = vmatpush1.bf16.msra.mxu0 0
          %1138 = vmatprep.subr.bf16.mxu0 0
          %1139 = vmatpush1.bf16.msra.mxu0 0
          %1140 = vmatprep.subr.bf16.mxu0 0
          %1141 = vmatpush1.bf16.msra.mxu0 0
          %1142 = vmatprep.subr.bf16.mxu0 0
          %1143 = vmatpush1.bf16.msra.mxu0 0
          %1144 = vmatprep.subr.bf16.mxu0 0
          %1145 = vmatpush1.bf16.msra.mxu0 0
          %1146 = vmatprep.subr.bf16.mxu0 0
          %1147 = vmatpush1.bf16.msra.mxu0 0
          %1148 = vmatprep.subr.bf16.mxu0 0
          %1149 = vmatpush1.bf16.msra.mxu0 0
          %1150 = vmatprep.subr.bf16.mxu0 0
          %1151 = vmatpush1.bf16.msra.mxu0 0
          %1152 = vmatprep.subr.bf16.mxu0 0
          %1153 = vmatpush1.bf16.msra.mxu0 0
          %1154 = vmatprep.subr.bf16.mxu0 0
          %1155 = vmatpush1.bf16.msra.mxu0 0
          %1156 = vmatprep.subr.bf16.mxu0 0
          %1157 = vmatpush1.bf16.msra.mxu0 0
          %1158 = vmatprep.subr.bf16.mxu0 0
          %1159 = vmatpush1.bf16.msra.mxu0 0
          %1160 = vmatprep.subr.bf16.mxu0 0
          %1161 = vmatpush1.bf16.msra.mxu0 0
          %1162 = vmatprep.mubr.bf16.mxu0 0
          %1163 = vmatmul.mubr.bf16.gmra.mrb[0].mxu0 %v1125
          %v1164 = vpop.f32.mrb[0].mxu0
          %v1165 = vadd.f32 0.0, %v1164
          %v1166 = vpop.f32.mrb[0].mxu0
          %v1167 = vpop.f32.mrb[0].mxu0
          %v1168 = vpop.f32.mrb[0].mxu0
          %1169 = vdwg.mxu0
          %v1170 = vadd.f32 %v1122, %v1165
        $region64: #{tpu_custom_call.1} parent=47 // loop_footer
          %s1053 = sadd.s32 %s1051, 1
        $region65: #{tpu_custom_call.1} parent=47 // loop_footer_branch
          %1050 = sbr.rel target = $region61
        $region66: #{tpu_custom_call.1} parent=47 // loop_exit
          _
        %v1171 = vld [vmem:[%s936 + $0x4] sm:$0xf]
        %v1172 = vld [vmem:[%s936 + $0x14] sm:$0xf]
        %1173 = vmatprep.subr.bf16.mxu0 0
        %1174 = vmatpush1.bf16.xpose.msra.mxu0 %v1171
        %1175 = vmatprep.subr.bf16.mxu0 0
        %1176 = vmatpush1.bf16.xpose.msra.mxu0 0
        %1177 = vmatprep.subr.bf16.mxu0 0
        %1178 = vmatpush1.bf16.xpose.msra.mxu0 0
        %1179 = vmatprep.subr.bf16.mxu0 0
        %1180 = vmatpush1.bf16.xpose.msra.mxu0 0
        %1181 = vmatprep.subr.bf16.mxu0 0
        %1182 = vmatpush1.bf16.xpose.msra.mxu0 0
        %1183 = vmatprep.subr.bf16.mxu0 0
        %1184 = vmatpush1.bf16.xpose.msra.mxu0 0
        %1185 = vmatprep.subr.bf16.mxu0 0
        %1186 = vmatpush1.bf16.xpose.msra.mxu0 0
        %1187 = vmatprep.subr.bf16.mxu0 0
        %1188 = vmatpush1.bf16.xpose.msra.mxu0 0
        %1189 = vmatprep.subr.bf16.mxu0 0
        %1190 = vmatpush1.bf16.xpose.msra.mxu0 0
        %1191 = vmatprep.subr.bf16.mxu0 0
        %1192 = vmatpush1.bf16.xpose.msra.mxu0 0
        %1193 = vmatprep.subr.bf16.mxu0 0
        %1194 = vmatpush1.bf16.xpose.msra.mxu0 0
        %1195 = vmatprep.subr.bf16.mxu0 0
        %1196 = vmatpush1.bf16.xpose.msra.mxu0 0
        %1197 = vmatprep.subr.bf16.mxu0 0
        %1198 = vmatpush1.bf16.xpose.msra.mxu0 0
        %1199 = vmatprep.subr.bf16.mxu0 0
        %1200 = vmatpush1.bf16.xpose.msra.mxu0 0
        %1201 = vmatprep.subr.bf16.mxu0 0
        %1202 = vmatpush1.bf16.xpose.msra.mxu0 0
        %1203 = vmatprep.subr.bf16.mxu0 0
        %1204 = vmatpush1.bf16.xpose.msra.mxu0 0
        %1205 = vmatprep.mubr.bf16.mxu0 0
        %1206 = vmatmul.mubr.bf16.gmra.mrb[0].mxu0 %v801
        %v1207 = vpop.f32.mrb[0].mxu0
        %v1208 = vadd.f32 0.0, %v1207
        %v1209 = vpop.f32.mrb[0].mxu0
        %v1210 = vpop.f32.mrb[0].mxu0
        %v1211 = vpop.f32.mrb[0].mxu0
        %1212 = vdwg.mxu0
        %v1213 = vsel %vm808, %v1208, -100000.0
        %v1214 = vsel %vm980, %v1213, -inf
        %1215 = vmax.xlane.f32.xlu0 %v1214
        %v1216 = vpop.xlane.xlu0 %1215
        %v1217 = vmax.f32 %v1056, %v1216
        %v1218 = vsub.f32 %v1056, %v1217
        %v1219 = vmul.f32 %v1218, 1.442695
        %v1220 = vpow.pop %v1219
        %v1221 = vsub.f32 %v1213, %v1217
        %v1222 = vmul.f32 %v1221, 1.442695
        %v1223 = vpow.pop %v1222
        %v1224 = vmul.f32 %v1220, %v1057
        %v1225 = vsel %vm980, %v1223, 0.0
        %1226 = vadd.xlane.f32.xlu0 %v1225
        %v1227 = vpop.xlane.xlu0 %1226
        %v1228 = vadd.f32 %v1224, %v1227
        %v1229 = vmul.f32 %v1220, %v1058
        %v1230 = vpack.c.bf16 %v1223, %v1223
        %v1232 = vsel %vm980, %v1230, 0
        %v1235 = vsel %vm1001, %v1172, 0
        %1237 = vmatprep.subr.bf16.mxu0 0
        %1238 = vmatpush1.bf16.msra.mxu0 %v1235
        %1239 = vmatprep.subr.bf16.mxu0 0
        %1240 = vmatpush1.bf16.msra.mxu0 0
        %1241 = vmatprep.subr.bf16.mxu0 0
        %1242 = vmatpush1.bf16.msra.mxu0 0
        %1243 = vmatprep.subr.bf16.mxu0 0
        %1244 = vmatpush1.bf16.msra.mxu0 0
        %1245 = vmatprep.subr.bf16.mxu0 0
        %1246 = vmatpush1.bf16.msra.mxu0 0
        %1247 = vmatprep.subr.bf16.mxu0 0
        %1248 = vmatpush1.bf16.msra.mxu0 0
        %1249 = vmatprep.subr.bf16.mxu0 0
        %1250 = vmatpush1.bf16.msra.mxu0 0
        %1251 = vmatprep.subr.bf16.mxu0 0
        %1252 = vmatpush1.bf16.msra.mxu0 0
        %1253 = vmatprep.subr.bf16.mxu0 0
        %1254 = vmatpush1.bf16.msra.mxu0 0
        %1255 = vmatprep.subr.bf16.mxu0 0
        %1256 = vmatpush1.bf16.msra.mxu0 0
        %1257 = vmatprep.subr.bf16.mxu0 0
        %1258 = vmatpush1.bf16.msra.mxu0 0
        %1259 = vmatprep.subr.bf16.mxu0 0
        %1260 = vmatpush1.bf16.msra.mxu0 0
        %1261 = vmatprep.subr.bf16.mxu0 0
        %1262 = vmatpush1.bf16.msra.mxu0 0
        %1263 = vmatprep.subr.bf16.mxu0 0
        %1264 = vmatpush1.bf16.msra.mxu0 0
        %1265 = vmatprep.subr.bf16.mxu0 0
        %1266 = vmatpush1.bf16.msra.mxu0 0
        %1267 = vmatprep.subr.bf16.mxu0 0
        %1268 = vmatpush1.bf16.msra.mxu0 0
        %1269 = vmatprep.mubr.bf16.mxu0 0
        %1270 = vmatmul.mubr.bf16.gmra.mrb[0].mxu0 %v1232
        %v1271 = vpop.f32.mrb[0].mxu0
        %v1272 = vadd.f32 0.0, %v1271
        %v1273 = vpop.f32.mrb[0].mxu0
        %v1274 = vpop.f32.mrb[0].mxu0
        %v1275 = vpop.f32.mrb[0].mxu0
        %1276 = vdwg.mxu0
        %v1277 = vadd.f32 %v1229, %v1272
        %v1278 = vrcp.pop %v1228
        %v1279 = vmul.f32 %v1277, %v1278
        %v1280 = vpack.c.bf16 %v1279, %v1279
        %1281 = vst [vmem:[#allocation3 + $0x4] sm:$0xf] %v1280
        // While loop
        $region67: #{tpu_custom_call.1} parent=47 // loop_pre_header
          _
        $region68: #{tpu_custom_call.1} parent=47 // loop_header
          %s1283 = sphi 0, %s1285
          %p1284 = scmp.ge.s32.totalorder %s1283, %s26
          %v1288 = vphi -inf, %v1342
          %v1289 = vphi 0.0, %v1353
          %v1290 = vphi 0.0, %v1402
        $region69: #{tpu_custom_call.1} parent=47 // loop_header_branch
          %1287 = sbr.rel (%p1284) target = $region73
        $region70: #{tpu_custom_call.1} parent=47 // loop_body
          %s1291 = smul.u32 %s1283, 8
          %s1292 = sshra.s32 %s1291, 3
          %s1293 = sand.u32 %s1291, 7
          %s1294 = smul.u32 %s1292, 8
          %s1295 = smul.addr %s1294, 4
          %s1296 = scalar_lea.vmem [#allocation2], %s1295
          %v1297 = vld [vmem:[%s1296 + $0x8] sm:$0xf]
          %v1298 = vld [vmem:[%s1296 + $0x18] sm:$0xf]
          %1299 = vmatprep.subr.bf16.mxu0 0
          %1300 = vmatpush1.bf16.xpose.msra.mxu0 %v1297
          %1301 = vmatprep.subr.bf16.mxu0 0
          %1302 = vmatpush1.bf16.xpose.msra.mxu0 0
          %1303 = vmatprep.subr.bf16.mxu0 0
          %1304 = vmatpush1.bf16.xpose.msra.mxu0 0
          %1305 = vmatprep.subr.bf16.mxu0 0
          %1306 = vmatpush1.bf16.xpose.msra.mxu0 0
          %1307 = vmatprep.subr.bf16.mxu0 0
          %1308 = vmatpush1.bf16.xpose.msra.mxu0 0
          %1309 = vmatprep.subr.bf16.mxu0 0
          %1310 = vmatpush1.bf16.xpose.msra.mxu0 0
          %1311 = vmatprep.subr.bf16.mxu0 0
          %1312 = vmatpush1.bf16.xpose.msra.mxu0 0
          %1313 = vmatprep.subr.bf16.mxu0 0
          %1314 = vmatpush1.bf16.xpose.msra.mxu0 0
          %1315 = vmatprep.subr.bf16.mxu0 0
          %1316 = vmatpush1.bf16.xpose.msra.mxu0 0
          %1317 = vmatprep.subr.bf16.mxu0 0
          %1318 = vmatpush1.bf16.xpose.msra.mxu0 0
          %1319 = vmatprep.subr.bf16.mxu0 0
          %1320 = vmatpush1.bf16.xpose.msra.mxu0 0
          %1321 = vmatprep.subr.bf16.mxu0 0
          %1322 = vmatpush1.bf16.xpose.msra.mxu0 0
          %1323 = vmatprep.subr.bf16.mxu0 0
          %1324 = vmatpush1.bf16.xpose.msra.mxu0 0
          %1325 = vmatprep.subr.bf16.mxu0 0
          %1326 = vmatpush1.bf16.xpose.msra.mxu0 0
          %1327 = vmatprep.subr.bf16.mxu0 0
          %1328 = vmatpush1.bf16.xpose.msra.mxu0 0
          %1329 = vmatprep.subr.bf16.mxu0 0
          %1330 = vmatpush1.bf16.xpose.msra.mxu0 0
          %1331 = vmatprep.mubr.bf16.mxu0 0
          %1332 = vmatmul.mubr.bf16.gmra.mrb[0].mxu0 %v802
          %v1333 = vpop.f32.mrb[0].mxu0
          %v1334 = vadd.f32 0.0, %v1333
          %v1335 = vpop.f32.mrb[0].mxu0
          %v1336 = vpop.f32.mrb[0].mxu0
          %v1337 = vpop.f32.mrb[0].mxu0
          %1338 = vdwg.mxu0
          %v1339 = vsel %vm980, %v1334, -inf
          %1340 = vmax.xlane.f32.xlu0 %v1339
          %v1341 = vpop.xlane.xlu0 %1340
          %v1342 = vmax.f32 %v1288, %v1341
          %v1343 = vsub.f32 %v1288, %v1342
          %v1344 = vmul.f32 %v1343, 1.442695
          %v1345 = vpow.pop %v1344
          %v1346 = vsub.f32 %v1334, %v1342
          %v1347 = vmul.f32 %v1346, 1.442695
          %v1348 = vpow.pop %v1347
          %v1349 = vmul.f32 %v1345, %v1289
          %v1350 = vsel %vm980, %v1348, 0.0
          %1351 = vadd.xlane.f32.xlu0 %v1350
          %v1352 = vpop.xlane.xlu0 %1351
          %v1353 = vadd.f32 %v1349, %v1352
          %v1354 = vmul.f32 %v1345, %v1290
          %v1355 = vpack.c.bf16 %v1348, %v1348
          %v1357 = vsel %vm980, %v1355, 0
          %v1360 = vsel %vm1001, %v1298, 0
          %1362 = vmatprep.subr.bf16.mxu0 0
          %1363 = vmatpush1.bf16.msra.mxu0 %v1360
          %1364 = vmatprep.subr.bf16.mxu0 0
          %1365 = vmatpush1.bf16.msra.mxu0 0
          %1366 = vmatprep.subr.bf16.mxu0 0
          %1367 = vmatpush1.bf16.msra.mxu0 0
          %1368 = vmatprep.subr.bf16.mxu0 0
          %1369 = vmatpush1.bf16.msra.mxu0 0
          %1370 = vmatprep.subr.bf16.mxu0 0
          %1371 = vmatpush1.bf16.msra.mxu0 0
          %1372 = vmatprep.subr.bf16.mxu0 0
          %1373 = vmatpush1.bf16.msra.mxu0 0
          %1374 = vmatprep.subr.bf16.mxu0 0
          %1375 = vmatpush1.bf16.msra.mxu0 0
          %1376 = vmatprep.subr.bf16.mxu0 0
          %1377 = vmatpush1.bf16.msra.mxu0 0
          %1378 = vmatprep.subr.bf16.mxu0 0
          %1379 = vmatpush1.bf16.msra.mxu0 0
          %1380 = vmatprep.subr.bf16.mxu0 0
          %1381 = vmatpush1.bf16.msra.mxu0 0
          %1382 = vmatprep.subr.bf16.mxu0 0
          %1383 = vmatpush1.bf16.msra.mxu0 0
          %1384 = vmatprep.subr.bf16.mxu0 0
          %1385 = vmatpush1.bf16.msra.mxu0 0
          %1386 = vmatprep.subr.bf16.mxu0 0
          %1387 = vmatpush1.bf16.msra.mxu0 0
          %1388 = vmatprep.subr.bf16.mxu0 0
          %1389 = vmatpush1.bf16.msra.mxu0 0
          %1390 = vmatprep.subr.bf16.mxu0 0
          %1391 = vmatpush1.bf16.msra.mxu0 0
          %1392 = vmatprep.subr.bf16.mxu0 0
          %1393 = vmatpush1.bf16.msra.mxu0 0
          %1394 = vmatprep.mubr.bf16.mxu0 0
          %1395 = vmatmul.mubr.bf16.gmra.mrb[0].mxu0 %v1357
          %v1396 = vpop.f32.mrb[0].mxu0
          %v1397 = vadd.f32 0.0, %v1396
          %v1398 = vpop.f32.mrb[0].mxu0
          %v1399 = vpop.f32.mrb[0].mxu0
          %v1400 = vpop.f32.mrb[0].mxu0
          %1401 = vdwg.mxu0
          %v1402 = vadd.f32 %v1354, %v1397
        $region71: #{tpu_custom_call.1} parent=47 // loop_footer
          %s1285 = sadd.s32 %s1283, 1
        $region72: #{tpu_custom_call.1} parent=47 // loop_footer_branch
          %1282 = sbr.rel target = $region68
        $region73: #{tpu_custom_call.1} parent=47 // loop_exit
          _
        %v1403 = vld [vmem:[%s936 + $0x8] sm:$0xf]
        %v1404 = vld [vmem:[%s936 + $0x18] sm:$0xf]
        %1405 = vmatprep.subr.bf16.mxu0 0
        %1406 = vmatpush1.bf16.xpose.msra.mxu0 %v1403
        %1407 = vmatprep.subr.bf16.mxu0 0
        %1408 = vmatpush1.bf16.xpose.msra.mxu0 0
        %1409 = vmatprep.subr.bf16.mxu0 0
        %1410 = vmatpush1.bf16.xpose.msra.mxu0 0
        %1411 = vmatprep.subr.bf16.mxu0 0
        %1412 = vmatpush1.bf16.xpose.msra.mxu0 0
        %1413 = vmatprep.subr.bf16.mxu0 0
        %1414 = vmatpush1.bf16.xpose.msra.mxu0 0
        %1415 = vmatprep.subr.bf16.mxu0 0
        %1416 = vmatpush1.bf16.xpose.msra.mxu0 0
        %1417 = vmatprep.subr.bf16.mxu0 0
        %1418 = vmatpush1.bf16.xpose.msra.mxu0 0
        %1419 = vmatprep.subr.bf16.mxu0 0
        %1420 = vmatpush1.bf16.xpose.msra.mxu0 0
        %1421 = vmatprep.subr.bf16.mxu0 0
        %1422 = vmatpush1.bf16.xpose.msra.mxu0 0
        %1423 = vmatprep.subr.bf16.mxu0 0
        %1424 = vmatpush1.bf16.xpose.msra.mxu0 0
        %1425 = vmatprep.subr.bf16.mxu0 0
        %1426 = vmatpush1.bf16.xpose.msra.mxu0 0
        %1427 = vmatprep.subr.bf16.mxu0 0
        %1428 = vmatpush1.bf16.xpose.msra.mxu0 0
        %1429 = vmatprep.subr.bf16.mxu0 0
        %1430 = vmatpush1.bf16.xpose.msra.mxu0 0
        %1431 = vmatprep.subr.bf16.mxu0 0
        %1432 = vmatpush1.bf16.xpose.msra.mxu0 0
        %1433 = vmatprep.subr.bf16.mxu0 0
        %1434 = vmatpush1.bf16.xpose.msra.mxu0 0
        %1435 = vmatprep.subr.bf16.mxu0 0
        %1436 = vmatpush1.bf16.xpose.msra.mxu0 0
        %1437 = vmatprep.mubr.bf16.mxu0 0
        %1438 = vmatmul.mubr.bf16.gmra.mrb[0].mxu0 %v802
        %v1439 = vpop.f32.mrb[0].mxu0
        %v1440 = vadd.f32 0.0, %v1439
        %v1441 = vpop.f32.mrb[0].mxu0
        %v1442 = vpop.f32.mrb[0].mxu0
        %v1443 = vpop.f32.mrb[0].mxu0
        %1444 = vdwg.mxu0
        %v1445 = vsel %vm808, %v1440, -100000.0
        %v1446 = vsel %vm980, %v1445, -inf
        %1447 = vmax.xlane.f32.xlu0 %v1446
        %v1448 = vpop.xlane.xlu0 %1447
        %v1449 = vmax.f32 %v1288, %v1448
        %v1450 = vsub.f32 %v1288, %v1449
        %v1451 = vmul.f32 %v1450, 1.442695
        %v1452 = vpow.pop %v1451
        %v1453 = vsub.f32 %v1445, %v1449
        %v1454 = vmul.f32 %v1453, 1.442695
        %v1455 = vpow.pop %v1454
        %v1456 = vmul.f32 %v1452, %v1289
        %v1457 = vsel %vm980, %v1455, 0.0
        %1458 = vadd.xlane.f32.xlu0 %v1457
        %v1459 = vpop.xlane.xlu0 %1458
        %v1460 = vadd.f32 %v1456, %v1459
        %v1461 = vmul.f32 %v1452, %v1290
        %v1462 = vpack.c.bf16 %v1455, %v1455
        %v1464 = vsel %vm980, %v1462, 0
        %v1467 = vsel %vm1001, %v1404, 0
        %1469 = vmatprep.subr.bf16.mxu0 0
        %1470 = vmatpush1.bf16.msra.mxu0 %v1467
        %1471 = vmatprep.subr.bf16.mxu0 0
        %1472 = vmatpush1.bf16.msra.mxu0 0
        %1473 = vmatprep.subr.bf16.mxu0 0
        %1474 = vmatpush1.bf16.msra.mxu0 0
        %1475 = vmatprep.subr.bf16.mxu0 0
        %1476 = vmatpush1.bf16.msra.mxu0 0
        %1477 = vmatprep.subr.bf16.mxu0 0
        %1478 = vmatpush1.bf16.msra.mxu0 0
        %1479 = vmatprep.subr.bf16.mxu0 0
        %1480 = vmatpush1.bf16.msra.mxu0 0
        %1481 = vmatprep.subr.bf16.mxu0 0
        %1482 = vmatpush1.bf16.msra.mxu0 0
        %1483 = vmatprep.subr.bf16.mxu0 0
        %1484 = vmatpush1.bf16.msra.mxu0 0
        %1485 = vmatprep.subr.bf16.mxu0 0
        %1486 = vmatpush1.bf16.msra.mxu0 0
        %1487 = vmatprep.subr.bf16.mxu0 0
        %1488 = vmatpush1.bf16.msra.mxu0 0
        %1489 = vmatprep.subr.bf16.mxu0 0
        %1490 = vmatpush1.bf16.msra.mxu0 0
        %1491 = vmatprep.subr.bf16.mxu0 0
        %1492 = vmatpush1.bf16.msra.mxu0 0
        %1493 = vmatprep.subr.bf16.mxu0 0
        %1494 = vmatpush1.bf16.msra.mxu0 0
        %1495 = vmatprep.subr.bf16.mxu0 0
        %1496 = vmatpush1.bf16.msra.mxu0 0
        %1497 = vmatprep.subr.bf16.mxu0 0
        %1498 = vmatpush1.bf16.msra.mxu0 0
        %1499 = vmatprep.subr.bf16.mxu0 0
        %1500 = vmatpush1.bf16.msra.mxu0 0
        %1501 = vmatprep.mubr.bf16.mxu0 0
        %1502 = vmatmul.mubr.bf16.gmra.mrb[0].mxu0 %v1464
        %v1503 = vpop.f32.mrb[0].mxu0
        %v1504 = vadd.f32 0.0, %v1503
        %v1505 = vpop.f32.mrb[0].mxu0
        %v1506 = vpop.f32.mrb[0].mxu0
        %v1507 = vpop.f32.mrb[0].mxu0
        %1508 = vdwg.mxu0
        %v1509 = vadd.f32 %v1461, %v1504
        %v1510 = vrcp.pop %v1460
        %v1511 = vmul.f32 %v1509, %v1510
        %v1512 = vpack.c.bf16 %v1511, %v1511
        %1513 = vst [vmem:[#allocation3 + $0x8] sm:$0xf] %v1512
        // While loop
        $region74: #{tpu_custom_call.1} parent=47 // loop_pre_header
          _
        $region75: #{tpu_custom_call.1} parent=47 // loop_header
          %s1515 = sphi 0, %s1517
          %p1516 = scmp.ge.s32.totalorder %s1515, %s26
          %v1520 = vphi -inf, %v1574
          %v1521 = vphi 0.0, %v1585
          %v1522 = vphi 0.0, %v1634
        $region76: #{tpu_custom_call.1} parent=47 // loop_header_branch
          %1519 = sbr.rel (%p1516) target = $region80
        $region77: #{tpu_custom_call.1} parent=47 // loop_body
          %s1523 = smul.u32 %s1515, 8
          %s1524 = sshra.s32 %s1523, 3
          %s1525 = sand.u32 %s1523, 7
          %s1526 = smul.u32 %s1524, 8
          %s1527 = smul.addr %s1526, 4
          %s1528 = scalar_lea.vmem [#allocation2], %s1527
          %v1529 = vld [vmem:[%s1528 + $0xc] sm:$0xf]
          %v1530 = vld [vmem:[%s1528 + $0x1c] sm:$0xf]
          %1531 = vmatprep.subr.bf16.mxu0 0
          %1532 = vmatpush1.bf16.xpose.msra.mxu0 %v1529
          %1533 = vmatprep.subr.bf16.mxu0 0
          %1534 = vmatpush1.bf16.xpose.msra.mxu0 0
          %1535 = vmatprep.subr.bf16.mxu0 0
          %1536 = vmatpush1.bf16.xpose.msra.mxu0 0
          %1537 = vmatprep.subr.bf16.mxu0 0
          %1538 = vmatpush1.bf16.xpose.msra.mxu0 0
          %1539 = vmatprep.subr.bf16.mxu0 0
          %1540 = vmatpush1.bf16.xpose.msra.mxu0 0
          %1541 = vmatprep.subr.bf16.mxu0 0
          %1542 = vmatpush1.bf16.xpose.msra.mxu0 0
          %1543 = vmatprep.subr.bf16.mxu0 0
          %1544 = vmatpush1.bf16.xpose.msra.mxu0 0
          %1545 = vmatprep.subr.bf16.mxu0 0
          %1546 = vmatpush1.bf16.xpose.msra.mxu0 0
          %1547 = vmatprep.subr.bf16.mxu0 0
          %1548 = vmatpush1.bf16.xpose.msra.mxu0 0
          %1549 = vmatprep.subr.bf16.mxu0 0
          %1550 = vmatpush1.bf16.xpose.msra.mxu0 0
          %1551 = vmatprep.subr.bf16.mxu0 0
          %1552 = vmatpush1.bf16.xpose.msra.mxu0 0
          %1553 = vmatprep.subr.bf16.mxu0 0
          %1554 = vmatpush1.bf16.xpose.msra.mxu0 0
          %1555 = vmatprep.subr.bf16.mxu0 0
          %1556 = vmatpush1.bf16.xpose.msra.mxu0 0
          %1557 = vmatprep.subr.bf16.mxu0 0
          %1558 = vmatpush1.bf16.xpose.msra.mxu0 0
          %1559 = vmatprep.subr.bf16.mxu0 0
          %1560 = vmatpush1.bf16.xpose.msra.mxu0 0
          %1561 = vmatprep.subr.bf16.mxu0 0
          %1562 = vmatpush1.bf16.xpose.msra.mxu0 0
          %1563 = vmatprep.mubr.bf16.mxu0 0
          %1564 = vmatmul.mubr.bf16.gmra.mrb[0].mxu0 %v803
          %v1565 = vpop.f32.mrb[0].mxu0
          %v1566 = vadd.f32 0.0, %v1565
          %v1567 = vpop.f32.mrb[0].mxu0
          %v1568 = vpop.f32.mrb[0].mxu0
          %v1569 = vpop.f32.mrb[0].mxu0
          %1570 = vdwg.mxu0
          %v1571 = vsel %vm980, %v1566, -inf
          %1572 = vmax.xlane.f32.xlu0 %v1571
          %v1573 = vpop.xlane.xlu0 %1572
          %v1574 = vmax.f32 %v1520, %v1573
          %v1575 = vsub.f32 %v1520, %v1574
          %v1576 = vmul.f32 %v1575, 1.442695
          %v1577 = vpow.pop %v1576
          %v1578 = vsub.f32 %v1566, %v1574
          %v1579 = vmul.f32 %v1578, 1.442695
          %v1580 = vpow.pop %v1579
          %v1581 = vmul.f32 %v1577, %v1521
          %v1582 = vsel %vm980, %v1580, 0.0
          %1583 = vadd.xlane.f32.xlu0 %v1582
          %v1584 = vpop.xlane.xlu0 %1583
          %v1585 = vadd.f32 %v1581, %v1584
          %v1586 = vmul.f32 %v1577, %v1522
          %v1587 = vpack.c.bf16 %v1580, %v1580
          %v1589 = vsel %vm980, %v1587, 0
          %v1592 = vsel %vm1001, %v1530, 0
          %1594 = vmatprep.subr.bf16.mxu0 0
          %1595 = vmatpush1.bf16.msra.mxu0 %v1592
          %1596 = vmatprep.subr.bf16.mxu0 0
          %1597 = vmatpush1.bf16.msra.mxu0 0
          %1598 = vmatprep.subr.bf16.mxu0 0
          %1599 = vmatpush1.bf16.msra.mxu0 0
          %1600 = vmatprep.subr.bf16.mxu0 0
          %1601 = vmatpush1.bf16.msra.mxu0 0
          %1602 = vmatprep.subr.bf16.mxu0 0
          %1603 = vmatpush1.bf16.msra.mxu0 0
          %1604 = vmatprep.subr.bf16.mxu0 0
          %1605 = vmatpush1.bf16.msra.mxu0 0
          %1606 = vmatprep.subr.bf16.mxu0 0
          %1607 = vmatpush1.bf16.msra.mxu0 0
          %1608 = vmatprep.subr.bf16.mxu0 0
          %1609 = vmatpush1.bf16.msra.mxu0 0
          %1610 = vmatprep.subr.bf16.mxu0 0
          %1611 = vmatpush1.bf16.msra.mxu0 0
          %1612 = vmatprep.subr.bf16.mxu0 0
          %1613 = vmatpush1.bf16.msra.mxu0 0
          %1614 = vmatprep.subr.bf16.mxu0 0
          %1615 = vmatpush1.bf16.msra.mxu0 0
          %1616 = vmatprep.subr.bf16.mxu0 0
          %1617 = vmatpush1.bf16.msra.mxu0 0
          %1618 = vmatprep.subr.bf16.mxu0 0
          %1619 = vmatpush1.bf16.msra.mxu0 0
          %1620 = vmatprep.subr.bf16.mxu0 0
          %1621 = vmatpush1.bf16.msra.mxu0 0
          %1622 = vmatprep.subr.bf16.mxu0 0
          %1623 = vmatpush1.bf16.msra.mxu0 0
          %1624 = vmatprep.subr.bf16.mxu0 0
          %1625 = vmatpush1.bf16.msra.mxu0 0
          %1626 = vmatprep.mubr.bf16.mxu0 0
          %1627 = vmatmul.mubr.bf16.gmra.mrb[0].mxu0 %v1589
          %v1628 = vpop.f32.mrb[0].mxu0
          %v1629 = vadd.f32 0.0, %v1628
          %v1630 = vpop.f32.mrb[0].mxu0
          %v1631 = vpop.f32.mrb[0].mxu0
          %v1632 = vpop.f32.mrb[0].mxu0
          %1633 = vdwg.mxu0
          %v1634 = vadd.f32 %v1586, %v1629
        $region78: #{tpu_custom_call.1} parent=47 // loop_footer
          %s1517 = sadd.s32 %s1515, 1
        $region79: #{tpu_custom_call.1} parent=47 // loop_footer_branch
          %1514 = sbr.rel target = $region75
        $region80: #{tpu_custom_call.1} parent=47 // loop_exit
          _
        %v1635 = vld [vmem:[%s936 + $0xc] sm:$0xf]
        %v1636 = vld [vmem:[%s936 + $0x1c] sm:$0xf]
        %1637 = vmatprep.subr.bf16.mxu0 0
        %1638 = vmatpush1.bf16.xpose.msra.mxu0 %v1635
        %1639 = vmatprep.subr.bf16.mxu0 0
        %1640 = vmatpush1.bf16.xpose.msra.mxu0 0
        %1641 = vmatprep.subr.bf16.mxu0 0
        %1642 = vmatpush1.bf16.xpose.msra.mxu0 0
        %1643 = vmatprep.subr.bf16.mxu0 0
        %1644 = vmatpush1.bf16.xpose.msra.mxu0 0
        %1645 = vmatprep.subr.bf16.mxu0 0
        %1646 = vmatpush1.bf16.xpose.msra.mxu0 0
        %1647 = vmatprep.subr.bf16.mxu0 0
        %1648 = vmatpush1.bf16.xpose.msra.mxu0 0
        %1649 = vmatprep.subr.bf16.mxu0 0
        %1650 = vmatpush1.bf16.xpose.msra.mxu0 0
        %1651 = vmatprep.subr.bf16.mxu0 0
        %1652 = vmatpush1.bf16.xpose.msra.mxu0 0
        %1653 = vmatprep.subr.bf16.mxu0 0
        %1654 = vmatpush1.bf16.xpose.msra.mxu0 0
        %1655 = vmatprep.subr.bf16.mxu0 0
        %1656 = vmatpush1.bf16.xpose.msra.mxu0 0
        %1657 = vmatprep.subr.bf16.mxu0 0
        %1658 = vmatpush1.bf16.xpose.msra.mxu0 0
        %1659 = vmatprep.subr.bf16.mxu0 0
        %1660 = vmatpush1.bf16.xpose.msra.mxu0 0
        %1661 = vmatprep.subr.bf16.mxu0 0
        %1662 = vmatpush1.bf16.xpose.msra.mxu0 0
        %1663 = vmatprep.subr.bf16.mxu0 0
        %1664 = vmatpush1.bf16.xpose.msra.mxu0 0
        %1665 = vmatprep.subr.bf16.mxu0 0
        %1666 = vmatpush1.bf16.xpose.msra.mxu0 0
        %1667 = vmatprep.subr.bf16.mxu0 0
        %1668 = vmatpush1.bf16.xpose.msra.mxu0 0
        %1669 = vmatprep.mubr.bf16.mxu0 0
        %1670 = vmatmul.mubr.bf16.gmra.mrb[0].mxu0 %v803
        %v1671 = vpop.f32.mrb[0].mxu0
        %v1672 = vadd.f32 0.0, %v1671
        %v1673 = vpop.f32.mrb[0].mxu0
        %v1674 = vpop.f32.mrb[0].mxu0
        %v1675 = vpop.f32.mrb[0].mxu0
        %1676 = vdwg.mxu0
        %v1677 = vsel %vm808, %v1672, -100000.0
        %v1678 = vsel %vm980, %v1677, -inf
        %1679 = vmax.xlane.f32.xlu0 %v1678
        %v1680 = vpop.xlane.xlu0 %1679
        %v1681 = vmax.f32 %v1520, %v1680
        %v1682 = vsub.f32 %v1520, %v1681
        %v1683 = vmul.f32 %v1682, 1.442695
        %v1684 = vpow.pop %v1683
        %v1685 = vsub.f32 %v1677, %v1681
        %v1686 = vmul.f32 %v1685, 1.442695
        %v1687 = vpow.pop %v1686
        %v1688 = vmul.f32 %v1684, %v1521
        %v1689 = vsel %vm980, %v1687, 0.0
        %1690 = vadd.xlane.f32.xlu0 %v1689
        %v1691 = vpop.xlane.xlu0 %1690
        %v1692 = vadd.f32 %v1688, %v1691
        %v1693 = vmul.f32 %v1684, %v1522
        %v1694 = vpack.c.bf16 %v1687, %v1687
        %v1696 = vsel %vm980, %v1694, 0
        %v1699 = vsel %vm1001, %v1636, 0
        %1701 = vmatprep.subr.bf16.mxu0 0
        %1702 = vmatpush1.bf16.msra.mxu0 %v1699
        %1703 = vmatprep.subr.bf16.mxu0 0
        %1704 = vmatpush1.bf16.msra.mxu0 0
        %1705 = vmatprep.subr.bf16.mxu0 0
        %1706 = vmatpush1.bf16.msra.mxu0 0
        %1707 = vmatprep.subr.bf16.mxu0 0
        %1708 = vmatpush1.bf16.msra.mxu0 0
        %1709 = vmatprep.subr.bf16.mxu0 0
        %1710 = vmatpush1.bf16.msra.mxu0 0
        %1711 = vmatprep.subr.bf16.mxu0 0
        %1712 = vmatpush1.bf16.msra.mxu0 0
        %1713 = vmatprep.subr.bf16.mxu0 0
        %1714 = vmatpush1.bf16.msra.mxu0 0
        %1715 = vmatprep.subr.bf16.mxu0 0
        %1716 = vmatpush1.bf16.msra.mxu0 0
        %1717 = vmatprep.subr.bf16.mxu0 0
        %1718 = vmatpush1.bf16.msra.mxu0 0
        %1719 = vmatprep.subr.bf16.mxu0 0
        %1720 = vmatpush1.bf16.msra.mxu0 0
        %1721 = vmatprep.subr.bf16.mxu0 0
        %1722 = vmatpush1.bf16.msra.mxu0 0
        %1723 = vmatprep.subr.bf16.mxu0 0
        %1724 = vmatpush1.bf16.msra.mxu0 0
        %1725 = vmatprep.subr.bf16.mxu0 0
        %1726 = vmatpush1.bf16.msra.mxu0 0
        %1727 = vmatprep.subr.bf16.mxu0 0
        %1728 = vmatpush1.bf16.msra.mxu0 0
        %1729 = vmatprep.subr.bf16.mxu0 0
        %1730 = vmatpush1.bf16.msra.mxu0 0
        %1731 = vmatprep.subr.bf16.mxu0 0
        %1732 = vmatpush1.bf16.msra.mxu0 0
        %1733 = vmatprep.mubr.bf16.mxu0 0
        %1734 = vmatmul.mubr.bf16.gmra.mrb[0].mxu0 %v1696
        %v1735 = vpop.f32.mrb[0].mxu0
        %v1736 = vadd.f32 0.0, %v1735
        %v1737 = vpop.f32.mrb[0].mxu0
        %v1738 = vpop.f32.mrb[0].mxu0
        %v1739 = vpop.f32.mrb[0].mxu0
        %1740 = vdwg.mxu0
        %v1741 = vadd.f32 %v1693, %v1736
        %v1742 = vrcp.pop %v1692
        %v1743 = vmul.f32 %v1741, %v1742
        %v1744 = vpack.c.bf16 %v1743, %v1743
        %1745 = vst [vmem:[#allocation3 + $0xc] sm:$0xf] %v1744
        %v1746 = vld [vmem:[#allocation3] sm:$0xff]
        %v1747 = vld [vmem:[#allocation3 + $0x8] sm:$0xff]
        %v1748 = vld [vmem:[%s3] sm:$0xf]
        %v1749 = vld [vmem:[%s3 + $0x4] sm:$0xf]
        %v1750 = vld [vmem:[%s3 + $0x8] sm:$0xf]
        %v1751 = vld [vmem:[%s3 + $0xc] sm:$0xf]
        %v1752 = vld [vmem:[%s3 + $0x10] sm:$0xf]
        %v1753 = vld [vmem:[%s3 + $0x14] sm:$0xf]
        %v1754 = vld [vmem:[%s3 + $0x18] sm:$0xf]
        %v1755 = vld [vmem:[%s3 + $0x1c] sm:$0xf]
        %v1756 = vld [vmem:[%s3 + $0x20] sm:$0xf]
        %v1757 = vld [vmem:[%s3 + $0x24] sm:$0xf]
        %v1758 = vld [vmem:[%s3 + $0x28] sm:$0xf]
        %v1759 = vld [vmem:[%s3 + $0x2c] sm:$0xf]
        %v1760 = vld [vmem:[%s3 + $0x30] sm:$0xf]
        %v1761 = vld [vmem:[%s3 + $0x34] sm:$0xf]
        %v1762 = vld [vmem:[%s3 + $0x38] sm:$0xf]
        %v1763 = vld [vmem:[%s3 + $0x3c] sm:$0xf]
        %v1764 = vld [vmem:[%s3 + $0x40] sm:$0xf]
        %v1765 = vld [vmem:[%s3 + $0x44] sm:$0xf]
        %v1766 = vld [vmem:[%s3 + $0x48] sm:$0xf]
        %v1767 = vld [vmem:[%s3 + $0x4c] sm:$0xf]
        %v1768 = vld [vmem:[%s3 + $0x50] sm:$0xf]
        %v1769 = vld [vmem:[%s3 + $0x54] sm:$0xf]
        %v1770 = vld [vmem:[%s3 + $0x58] sm:$0xf]
        %v1771 = vld [vmem:[%s3 + $0x5c] sm:$0xf]
        %v1772 = vld [vmem:[%s3 + $0x60] sm:$0xf]
        %v1773 = vld [vmem:[%s3 + $0x64] sm:$0xf]
        %v1774 = vld [vmem:[%s3 + $0x68] sm:$0xf]
        %v1775 = vld [vmem:[%s3 + $0x6c] sm:$0xf]
        %v1776 = vld [vmem:[%s3 + $0x70] sm:$0xf]
        %v1777 = vld [vmem:[%s3 + $0x74] sm:$0xf]
        %v1778 = vld [vmem:[%s3 + $0x78] sm:$0xf]
        %v1779 = vld [vmem:[%s3 + $0x7c] sm:$0xf]
        %v1780 = vld [vmem:[%s3 + $0x80] sm:$0xf]
        %v1781 = vld [vmem:[%s3 + $0x84] sm:$0xf]
        %v1782 = vld [vmem:[%s3 + $0x88] sm:$0xf]
        %v1783 = vld [vmem:[%s3 + $0x8c] sm:$0xf]
        %v1784 = vld [vmem:[%s3 + $0x90] sm:$0xf]
        %v1785 = vld [vmem:[%s3 + $0x94] sm:$0xf]
        %v1786 = vld [vmem:[%s3 + $0x98] sm:$0xf]
        %v1787 = vld [vmem:[%s3 + $0x9c] sm:$0xf]
        %v1788 = vld [vmem:[%s3 + $0xa0] sm:$0xf]
        %v1789 = vld [vmem:[%s3 + $0xa4] sm:$0xf]
        %v1790 = vld [vmem:[%s3 + $0xa8] sm:$0xf]
        %v1791 = vld [vmem:[%s3 + $0xac] sm:$0xf]
        %v1792 = vld [vmem:[%s3 + $0xb0] sm:$0xf]
        %v1793 = vld [vmem:[%s3 + $0xb4] sm:$0xf]
        %v1794 = vld [vmem:[%s3 + $0xb8] sm:$0xf]
        %v1795 = vld [vmem:[%s3 + $0xbc] sm:$0xf]
        %v1796 = vld [vmem:[%s3 + $0xc0] sm:$0xf]
        %v1797 = vld [vmem:[%s3 + $0xc4] sm:$0xf]
        %v1798 = vld [vmem:[%s3 + $0xc8] sm:$0xf]
        %v1799 = vld [vmem:[%s3 + $0xcc] sm:$0xf]
        %v1800 = vld [vmem:[%s3 + $0xd0] sm:$0xf]
        %v1801 = vld [vmem:[%s3 + $0xd4] sm:$0xf]
        %v1802 = vld [vmem:[%s3 + $0xd8] sm:$0xf]
        %v1803 = vld [vmem:[%s3 + $0xdc] sm:$0xf]
        %v1804 = vld [vmem:[%s3 + $0xe0] sm:$0xf]
        %v1805 = vld [vmem:[%s3 + $0xe4] sm:$0xf]
        %v1806 = vld [vmem:[%s3 + $0xe8] sm:$0xf]
        %v1807 = vld [vmem:[%s3 + $0xec] sm:$0xf]
        %v1808 = vld [vmem:[%s3 + $0xf0] sm:$0xf]
        %v1809 = vld [vmem:[%s3 + $0xf4] sm:$0xf]
        %v1810 = vld [vmem:[%s3 + $0xf8] sm:$0xf]
        %v1811 = vld [vmem:[%s3 + $0xfc] sm:$0xf]
        %v1812 = vld [vmem:[%s6] sm:$0x1]
        %v1814 = vlaneseq
        %v1815 = vshrl.u32 %v1814, 7
        %v1816 = vsub.s32 0, %v1815
        %v1817 = vrot.slane %v1812, %v1816
        %v1821 = vunpack.c.l.b16 %v1746
        %v1822 = vunpack.c.h.b16 %v1746
        %v1823 = vunpack.c.l.b16 %v1747
        %v1824 = vunpack.c.h.b16 %v1747
        %v1825 = vpack.c.b16 %v1821, %v1821
        %v1826 = vpack.c.b16 %v1822, %v1822
        %v1827 = vpack.c.b16 %v1823, %v1823
        %v1828 = vpack.c.b16 %v1824, %v1824
        %v1897 = vunpack.c.l.b16 %v1748
        %v1898 = vunpack.c.l.b16 %v1749
        %v1899 = vunpack.c.l.b16 %v1750
        %v1900 = vunpack.c.l.b16 %v1751
        %v1901 = vunpack.c.l.b16 %v1752
        %v1902 = vunpack.c.l.b16 %v1753
        %v1903 = vunpack.c.l.b16 %v1754
        %v1904 = vunpack.c.l.b16 %v1755
        %v1905 = vunpack.c.l.b16 %v1756
        %v1906 = vunpack.c.l.b16 %v1757
        %v1907 = vunpack.c.l.b16 %v1758
        %v1908 = vunpack.c.l.b16 %v1759
        %v1909 = vunpack.c.l.b16 %v1760
        %v1910 = vunpack.c.l.b16 %v1761
        %v1911 = vunpack.c.l.b16 %v1762
        %v1912 = vunpack.c.l.b16 %v1763
        %v1913 = vunpack.c.l.b16 %v1764
        %v1914 = vunpack.c.l.b16 %v1765
        %v1915 = vunpack.c.l.b16 %v1766
        %v1916 = vunpack.c.l.b16 %v1767
        %v1917 = vunpack.c.l.b16 %v1768
        %v1918 = vunpack.c.l.b16 %v1769
        %v1919 = vunpack.c.l.b16 %v1770
        %v1920 = vunpack.c.l.b16 %v1771
        %v1921 = vunpack.c.l.b16 %v1772
        %v1922 = vunpack.c.l.b16 %v1773
        %v1923 = vunpack.c.l.b16 %v1774
        %v1924 = vunpack.c.l.b16 %v1775
        %v1925 = vunpack.c.l.b16 %v1776
        %v1926 = vunpack.c.l.b16 %v1777
        %v1927 = vunpack.c.l.b16 %v1778
        %v1928 = vunpack.c.l.b16 %v1779
        %v1929 = vunpack.c.l.b16 %v1780
        %v1930 = vunpack.c.l.b16 %v1781
        %v1931 = vunpack.c.l.b16 %v1782
        %v1932 = vunpack.c.l.b16 %v1783
        %v1933 = vunpack.c.l.b16 %v1784
        %v1934 = vunpack.c.l.b16 %v1785
        %v1935 = vunpack.c.l.b16 %v1786
        %v1936 = vunpack.c.l.b16 %v1787
        %v1937 = vunpack.c.l.b16 %v1788
        %v1938 = vunpack.c.l.b16 %v1789
        %v1939 = vunpack.c.l.b16 %v1790
        %v1940 = vunpack.c.l.b16 %v1791
        %v1941 = vunpack.c.l.b16 %v1792
        %v1942 = vunpack.c.l.b16 %v1793
        %v1943 = vunpack.c.l.b16 %v1794
        %v1944 = vunpack.c.l.b16 %v1795
        %v1945 = vunpack.c.l.b16 %v1796
        %v1946 = vunpack.c.l.b16 %v1797
        %v1947 = vunpack.c.l.b16 %v1798
        %v1948 = vunpack.c.l.b16 %v1799
        %v1949 = vunpack.c.l.b16 %v1800
        %v1950 = vunpack.c.l.b16 %v1801
        %v1951 = vunpack.c.l.b16 %v1802
        %v1952 = vunpack.c.l.b16 %v1803
        %v1953 = vunpack.c.l.b16 %v1804
        %v1954 = vunpack.c.l.b16 %v1805
        %v1955 = vunpack.c.l.b16 %v1806
        %v1956 = vunpack.c.l.b16 %v1807
        %v1957 = vunpack.c.l.b16 %v1808
        %v1958 = vunpack.c.l.b16 %v1809
        %v1959 = vunpack.c.l.b16 %v1810
        %v1960 = vunpack.c.l.b16 %v1811
        %v1961 = vpack.c.b16 %v1898, %v1897
        %v1962 = vpack.c.b16 %v1900, %v1899
        %v1963 = vpack.c.b16 %v1902, %v1901
        %v1964 = vpack.c.b16 %v1904, %v1903
        %v1965 = vpack.c.b16 %v1906, %v1905
        %v1966 = vpack.c.b16 %v1908, %v1907
        %v1967 = vpack.c.b16 %v1910, %v1909
        %v1968 = vpack.c.b16 %v1912, %v1911
        %v1969 = vpack.c.b16 %v1914, %v1913
        %v1970 = vpack.c.b16 %v1916, %v1915
        %v1971 = vpack.c.b16 %v1918, %v1917
        %v1972 = vpack.c.b16 %v1920, %v1919
        %v1973 = vpack.c.b16 %v1922, %v1921
        %v1974 = vpack.c.b16 %v1924, %v1923
        %v1975 = vpack.c.b16 %v1926, %v1925
        %v1976 = vpack.c.b16 %v1928, %v1927
        %v1977 = vpack.c.b16 %v1930, %v1929
        %v1978 = vpack.c.b16 %v1932, %v1931
        %v1979 = vpack.c.b16 %v1934, %v1933
        %v1980 = vpack.c.b16 %v1936, %v1935
        %v1981 = vpack.c.b16 %v1938, %v1937
        %v1982 = vpack.c.b16 %v1940, %v1939
        %v1983 = vpack.c.b16 %v1942, %v1941
        %v1984 = vpack.c.b16 %v1944, %v1943
        %v1985 = vpack.c.b16 %v1946, %v1945
        %v1986 = vpack.c.b16 %v1948, %v1947
        %v1987 = vpack.c.b16 %v1950, %v1949
        %v1988 = vpack.c.b16 %v1952, %v1951
        %v1989 = vpack.c.b16 %v1954, %v1953
        %v1990 = vpack.c.b16 %v1956, %v1955
        %v1991 = vpack.c.b16 %v1958, %v1957
        %v1992 = vpack.c.b16 %v1960, %v1959
        %2025 = vmatprep.subr.bf16.mxu0 0
        %2026 = vmatpush1.bf16.msra.mxu0 %v1961
        %2027 = vmatprep.subr.bf16.mxu0 0
        %2028 = vmatpush1.bf16.msra.mxu0 %v1962
        %2029 = vmatprep.subr.bf16.mxu0 0
        %2030 = vmatpush1.bf16.msra.mxu0 %v1963
        %2031 = vmatprep.subr.bf16.mxu0 0
        %2032 = vmatpush1.bf16.msra.mxu0 %v1964
        %2033 = vmatprep.subr.bf16.mxu0 0
        %2034 = vmatpush1.bf16.msra.mxu0 %v1965
        %2035 = vmatprep.subr.bf16.mxu0 0
        %2036 = vmatpush1.bf16.msra.mxu0 %v1966
        %2037 = vmatprep.subr.bf16.mxu0 0
        %2038 = vmatpush1.bf16.msra.mxu0 %v1967
        %2039 = vmatprep.subr.bf16.mxu0 0
        %2040 = vmatpush1.bf16.msra.mxu0 %v1968
        %2041 = vmatprep.subr.bf16.mxu0 0
        %2042 = vmatpush1.bf16.msra.mxu0 %v1969
        %2043 = vmatprep.subr.bf16.mxu0 0
        %2044 = vmatpush1.bf16.msra.mxu0 %v1970
        %2045 = vmatprep.subr.bf16.mxu0 0
        %2046 = vmatpush1.bf16.msra.mxu0 %v1971
        %2047 = vmatprep.subr.bf16.mxu0 0
        %2048 = vmatpush1.bf16.msra.mxu0 %v1972
        %2049 = vmatprep.subr.bf16.mxu0 0
        %2050 = vmatpush1.bf16.msra.mxu0 %v1973
        %2051 = vmatprep.subr.bf16.mxu0 0
        %2052 = vmatpush1.bf16.msra.mxu0 %v1974
        %2053 = vmatprep.subr.bf16.mxu0 0
        %2054 = vmatpush1.bf16.msra.mxu0 %v1975
        %2055 = vmatprep.subr.bf16.mxu0 0
        %2056 = vmatpush1.bf16.msra.mxu0 %v1976
        %2057 = vmatprep.mubr.bf16.mxu0 %v1826
        %2058 = vmatmul.mubr.bf16.gmra.mrb[0].mxu0 %v1825
        %v2059 = vpop.f32.mrb[0].mxu0
        %v2060 = vadd.f32 %v1817, %v2059
        %v2061 = vpop.f32.mrb[0].mxu0
        %v2062 = vpop.f32.mrb[0].mxu0
        %v2063 = vpop.f32.mrb[0].mxu0
        %2064 = vdwg.mxu0
        %2065 = vmatprep.subr.bf16.mxu0 0
        %2066 = vmatpush1.bf16.msra.mxu0 %v1977
        %2067 = vmatprep.subr.bf16.mxu0 0
        %2068 = vmatpush1.bf16.msra.mxu0 %v1978
        %2069 = vmatprep.subr.bf16.mxu0 0
        %2070 = vmatpush1.bf16.msra.mxu0 %v1979
        %2071 = vmatprep.subr.bf16.mxu0 0
        %2072 = vmatpush1.bf16.msra.mxu0 %v1980
        %2073 = vmatprep.subr.bf16.mxu0 0
        %2074 = vmatpush1.bf16.msra.mxu0 %v1981
        %2075 = vmatprep.subr.bf16.mxu0 0
        %2076 = vmatpush1.bf16.msra.mxu0 %v1982
        %2077 = vmatprep.subr.bf16.mxu0 0
        %2078 = vmatpush1.bf16.msra.mxu0 %v1983
        %2079 = vmatprep.subr.bf16.mxu0 0
        %2080 = vmatpush1.bf16.msra.mxu0 %v1984
        %2081 = vmatprep.subr.bf16.mxu0 0
        %2082 = vmatpush1.bf16.msra.mxu0 %v1985
        %2083 = vmatprep.subr.bf16.mxu0 0
        %2084 = vmatpush1.bf16.msra.mxu0 %v1986
        %2085 = vmatprep.subr.bf16.mxu0 0
        %2086 = vmatpush1.bf16.msra.mxu0 %v1987
        %2087 = vmatprep.subr.bf16.mxu0 0
        %2088 = vmatpush1.bf16.msra.mxu0 %v1988
        %2089 = vmatprep.subr.bf16.mxu0 0
        %2090 = vmatpush1.bf16.msra.mxu0 %v1989
        %2091 = vmatprep.subr.bf16.mxu0 0
        %2092 = vmatpush1.bf16.msra.mxu0 %v1990
        %2093 = vmatprep.subr.bf16.mxu0 0
        %2094 = vmatpush1.bf16.msra.mxu0 %v1991
        %2095 = vmatprep.subr.bf16.mxu0 0
        %2096 = vmatpush1.bf16.msra.mxu0 %v1992
        %2097 = vmatprep.mubr.bf16.mxu0 %v1828
        %2098 = vmatmul.mubr.bf16.gmra.mrb[0].mxu0 %v1827
        %v2099 = vpop.f32.mrb[0].mxu0
        %v2100 = vadd.f32 %v2060, %v2099
        %v2101 = vpop.f32.mrb[0].mxu0
        %v2102 = vpop.f32.mrb[0].mxu0
        %v2103 = vpop.f32.mrb[0].mxu0
        %2104 = vdwg.mxu0
        %2105 = vst.msk [vmem:[%s283] sm:$0xff] %vm714, %v2100
        %s2106 = sand.u32 %s195, 1
        %s2107 = scalar_lea.sflag [#allocation5], %s2106
        %s2108 = sand.u32 %s195, 1
        %s2109 = smul.addr %s2108, 8
        %s2110 = scalar_lea.vmem [#allocation4], %s2109
        // Predicated region
        $region81: #{tpu_custom_call.1} parent=47 // pred_check
          %p2111 = pneg %p205
        $region82: #{tpu_custom_call.1} parent=47 // pred_check_branch
          %2113 = sbr.rel (%p2111) target = $region84
        $region83: #{tpu_custom_call.1} parent=47 // pred_region
          %s2115 = ssub.s32 128, 128
          %2116 = vsyncadd %s2107, %s2115
          %s2117 = sadd.s32 %s26, %s25
          %s2118 = smul.addr %s2117, 128
          %s2119 = scalar_lea.hbm %s7, %s2118
          %s2121 = sshll.u32 %s2110, 4
          %s2122 = int_to_ptr.vmem [resolvable:$true] %s2121
          %2124 = dma.vmem_to_hbm [thread:$0]  %s2122, 128, %s2119, %s2107
        $region84: #{tpu_custom_call.1} parent=47 // pred_fallthru
          _
      $region48: #{tpu_custom_call.1} parent=5 // pred_fallthru
        _
      %p2125 = scmp.le.s32.totalorder 2, %s16
      // Predicated region
      $region85: #{tpu_custom_call.1} parent=5 // pred_check
        %p2126 = pneg %p2125
      $region86: #{tpu_custom_call.1} parent=5 // pred_check_branch
        %2128 = sbr.rel (%p2126) target = $region88
      $region87: #{tpu_custom_call.1} parent=5 // pred_region
        %s2129 = ssub.s32 %s16, 2
        // Predicated region
        $region89: #{tpu_custom_call.1} parent=87 // pred_check
          %p2130 = pneg %p211
        $region90: #{tpu_custom_call.1} parent=87 // pred_check_branch
          %2132 = sbr.rel (%p2130) target = $region92
        $region91: #{tpu_custom_call.1} parent=87 // pred_region
          %s2133 = sand.u32 %s196, 1
          %s2134 = scalar_lea.sflag [#allocation5], %s2133
          %s2135 = sand.u32 %s196, 1
          %s2136 = smul.addr %s2135, 8
          %s2137 = scalar_lea.vmem [#allocation4], %s2136
          %2138 = dma.done %s2134, 128
        $region92: #{tpu_custom_call.1} parent=87 // pred_fallthru
          _
      $region88: #{tpu_custom_call.1} parent=5 // pred_fallthru
        _
    $region6: #{tpu_custom_call.1} parent=1 // loop_footer
      %s20 = sadd.s32 1, %s16
    $region7: #{tpu_custom_call.1} parent=1 // loop_footer_branch
      %15 = sbr.rel target = $region3
    $region8: #{tpu_custom_call.1} parent=1 // loop_exit
      _
    %2139 = vsyncpa [#allocation5], 1
    %s2140 = scalar_lea.sflag [#allocation5], 1
    %2141 = vsyncpa %s2140, 1

</llo_original>
